<compile_context>
chip_gen: v7x
topology: tpu7x:2x2x1
jax: 0.10.0
libtpu: 0.0.40
codegen_flags: <defaults>
</compile_context>

<pallas_src>
import jax
import jax.numpy as jnp
from jax.experimental import pallas as pl
from jax.experimental.pallas import tpu as pltpu

# Control points from the PyTorch module (compile-time constants; the kernel
# exploits c1 == 0 for all of them and the +-0.053 / 0.075 / 0.105 structure).
_CONTROL_POINTS = (
    (0.0, 0.0, 0.0),
    (0.0, 0.0, 0.0),
    (0.053, -0.0, 0.075),
    (-0.053, 0.0, 0.075),
    (0.053, -0.0, 0.105),
    (-0.053, 0.0, 0.105),
)

_LANES = 128   # lane axis of the pose layout (poses spread over rows x lanes)
_SUB = 16      # sublane rows per in-kernel chunk (~2 vregs per intermediate)


def _cdiv(a, b):
    return -(-a // b)


def _tpu_config():
    """Best-effort (row_tile_max, vmem_limit_bytes_or_None, cores_per_chip)."""
    row_tile_max, vmem_limit, cores = 512, None, 1
    kind = ""
    try:
        kind = jax.devices()[0].device_kind.lower()
    except Exception:
        pass
    # v6e / v7x have 32 MiB scoped-VMEM headroom -> bigger blocks amortize the
    # per-grid-step overhead further and lengthen DMA bursts.
    if ("v6" in kind) or ("v7" in kind):
        row_tile_max, vmem_limit = 1024, 32 << 20
    try:
        info = pltpu.get_tpu_info()
        for name in ("num_cores", "num_tensorcores", "tensorcores_per_chip",
                     "cores_per_chip", "core_count"):
            v = getattr(info, name, None)
            if isinstance(v, int) and v >= 1:
                cores = v
                break
    except Exception:
        pass
    return row_tile_max, vmem_limit, cores


def _rot_cols02(az, el, th):
    """Columns 0 and 2 of R = Rz(th) @ Ry(el) @ Rx(az), elementwise per lane.

    Column 1 is never needed: every control point has c1 == 0, and XLA will
    not fold x*0.0 for floats, so it is simply not computed.
    """
    cx, sx = jnp.cos(az), jnp.sin(az)
    cy, sy = jnp.cos(el), jnp.sin(el)
    cz, sz = jnp.cos(th), jnp.sin(th)
    col0 = (cz * cy, sz * cy, -sy)
    sycx = sy * cx
    col2 = (cz * sycx + sz * sx, sz * sycx - cz * sx, cy * cx)
    return col0, col2


def _pose_bc_loss_kernel(dt_ref, ex_ref, ey_ref, o_ref):
    # o_ref: (row_tile, 128) per-lane accumulator of HALF the per-pose |diff|
    # sum, resident in VMEM across the inner ("arbitrary") grid axis.
    @pl.when(pl.program_id(1) == 0)
    def _init():
        o_ref[...] = jnp.zeros_like(o_ref)

    nsub = o_ref.shape[0] // _SUB

    # Sub-chunk loop keeps every live intermediate at ~2 vregs so the trig /
    # delta chain stays in registers instead of round-tripping through VMEM.
    @pl.loop(0, nsub)
    def _chunk(s):
        r0 = pl.multiple_of(s * _SUB, _SUB)
        rows = pl.ds(r0, _SUB)

        x0, x2 = _rot_cols02(ex_ref[0, rows, :], ex_ref[1, rows, :],
                             ex_ref[2, rows, :])
        y0, y2 = _rot_cols02(ey_ref[0, rows, :], ey_ref[1, rows, :],
                             ey_ref[2, rows, :])
        # Form rotation deltas immediately; x0/x2/y0/y2 die here.
        dr0 = tuple(x0[k] - y0[k] for k in range(3))
        dr2 = tuple(x2[k] - y2[k] for k in range(3))

        acc = None
        for k in range(3):            # output coordinate of the grasp points
            dt = dt_ref[k, rows, :]   # translation delta (precomputed in wrapper)
            a = jnp.abs(0.053 * dr0[k])
            b1 = jnp.abs(0.075 * dr2[k] + dt)
            b2 = jnp.abs(0.105 * dr2[k] + dt)
            # 6 control points per coordinate:
            #   (0, 0, 0) x2         -> 2*|dt|
            #   (+-0.053, 0, 0.075)  -> |b1+a| + |b1-a| = 2*max(|b1|, |a|)
            #   (+-0.053, 0, 0.105)  -> |b2+a| + |b2-a| = 2*max(|b2|, |a|)
            # The global factor 2 is applied once in the wrapper.
            t = jnp.abs(dt) + jnp.maximum(b1, a) + jnp.maximum(b2, a)
            acc = t if acc is None else acc + t

        o_ref[rows, :] = o_ref[rows, :] + acc


def pose_bc_loss(x, y):
    """Pallas implementation of PoseBCLoss.forward(x, y)."""
    x = jnp.reshape(x, (-1, 6)).astype(jnp.float32)
    y = jnp.reshape(y, (-1, 6)).astype(jnp.float32)
    n = x.shape[0]

    row_tile_max, vmem_limit, cores = _tpu_config()

    rows_needed = max(1, _cdiv(n, _LANES))
    row_tile = min(row_tile_max, _cdiv(rows_needed, _SUB) * _SUB)
    tiles_total = _cdiv(rows_needed, row_tile)
    # Only split across TensorCores when the chip has >1 and there is enough
    # work for both; otherwise the split just adds a fully padded grid step.
    num_splits = 2 if (cores >= 2 and tiles_total >= 2) else 1
    steps = _cdiv(tiles_total, num_splits)
    r_pad = num_splits * steps * row_tile
    n_pad = r_pad * _LANES

    # TODO(synk): accept caller-provided (3, R, 128) layouts so this
    # (memory-bound) pad+transpose relayout pass disappears entirely.
    def relayout(a):                        # (n, 3) -> (3, r_pad, 128)
        a = jnp.pad(a, ((0, n_pad - n), (0, 0)))
        return a.T.reshape(3, r_pad, _LANES)

    dt_l = relayout(x[:, :3] - y[:, :3])    # translation delta folded in here
    ex_l = relayout(x[:, 3:])               # (az, el, th) of x
    ey_l = relayout(y[:, 3:])               # (az, el, th) of y

    in_spec = pl.BlockSpec((3, row_tile, _LANES),
                           lambda i, j: (0, i * steps + j, 0))

    partial = pl.pallas_call(
        _pose_bc_loss_kernel,
        out_shape=jax.ShapeDtypeStruct((num_splits * row_tile, _LANES),
                                       jnp.float32),
        grid_spec=pltpu.PrefetchScalarGridSpec(
            num_scalar_prefetch=0,
            grid=(num_splits, steps),
            in_specs=[in_spec, in_spec, in_spec],
            out_specs=pl.BlockSpec((row_tile, _LANES), lambda i, j: (i, 0)),
        ),
        compiler_params=pltpu.CompilerParams(
            # TODO(synk): on v7x, verify the size-2 leading axis actually
            # shards across both TensorCores; if not, move to CORE_PARALLEL.
            dimension_semantics=("parallel", "arbitrary"),
            vmem_limit_bytes=vmem_limit),
    )(dt_l, ex_l, ey_l)

    # partial holds HALF of the per-pose |diff| sums:
    # mean = 2*sum / (n*6*3) = sum / (9*n).
    return jnp.sum(partial) / jnp.float32(n * 9)


# ---------------- pure-JAX reference (for correctness check only) ----------------
def _to_rotation_matrix_ref(angles):
    az, el, th = angles[..., 0], angles[..., 1], angles[..., 2]
    cx, sx = jnp.cos(az), jnp.sin(az)
    cy, sy = jnp.cos(el), jnp.sin(el)
    cz, sz = jnp.cos(th), jnp.sin(th)
    ones, zeros = jnp.ones_like(cx), jnp.zeros_like(cx)
    rx = jnp.stack([ones, zeros, zeros, zeros, cx, -sx, zeros, sx, cx], -1).reshape(*az.shape, 3, 3)
    ry = jnp.stack([cy, zeros, sy, zeros, ones, zeros, -sy, zeros, cy], -1).reshape(*az.shape, 3, 3)
    rz = jnp.stack([cz, -sz, zeros, sz, cz, zeros, zeros, zeros, ones], -1).reshape(*az.shape, 3, 3)
    return rz @ (ry @ rx)


def _pose_bc_loss_ref(x, y):
    cp = jnp.asarray(_CONTROL_POINTS, jnp.float32)

    def cp_from_action(a):
        a = jnp.reshape(a, (-1, 6)).astype(jnp.float32)
        trans, eulers = a[:, :3], a[:, 3:]
        rot = _to_rotation_matrix_ref(eulers)                        # (N,3,3)
        gp = jnp.einsum("pj,nkj->npk", cp, rot) + trans[:, None, :]  # (N,6,3)
        return gp

    return jnp.mean(jnp.abs(cp_from_action(x) - cp_from_action(y)))


if __name__ == "__main__":
    key = jax.random.PRNGKey(0)
    kx, ky, kx2, ky2 = jax.random.split(key, 4)

    loss_fn = jax.jit(pose_bc_loss)

    # Small case consistent with the module: a (2, 4) batch of 6-dim actions.
    x = jax.random.normal(kx, (2, 4, 6), dtype=jnp.float32)
    y = jax.random.normal(ky, (2, 4, 6), dtype=jnp.float32)
    out = jax.block_until_ready(loss_fn(x, y))
    ref = jax.block_until_ready(_pose_bc_loss_ref(x, y))
    if not jnp.allclose(out, ref, rtol=1e-5, atol=1e-6):
        raise AssertionError(f"mismatch (small): kernel={out} ref={ref}")

    # Second case exercising in-tile padding (185 poses, not a multiple of 128).
    x2 = jax.random.normal(kx2, (5, 37, 6), dtype=jnp.float32)
    y2 = jax.random.normal(ky2, (5, 37, 6), dtype=jnp.float32)
    out2 = jax.block_until_ready(loss_fn(x2, y2))
    ref2 = jax.block_until_ready(_pose_bc_loss_ref(x2, y2))
    if not jnp.allclose(out2, ref2, rtol=1e-5, atol=1e-6):
        raise AssertionError(f"mismatch (padded): kernel={out2} ref={ref2}")

    print("KERNEL_OK")
</pallas_src>

<mosaic_0001>
module attributes {stable_mosaic.version = 11 : i64} {
  func.func @_pose_bc_loss_kernel(%arg0: i32, %arg1: i32, %arg2: memref<3x16x128xf32, #tpu.memory_space<vmem>>, %arg3: memref<3x16x128xf32, #tpu.memory_space<vmem>>, %arg4: memref<3x16x128xf32, #tpu.memory_space<vmem>>, %arg5: memref<16x128xf32, #tpu.memory_space<vmem>>) attributes {dimension_semantics = [#tpu.dimension_semantics<parallel>, #tpu.dimension_semantics<arbitrary>], iteration_bounds = array<i64: 1, 1>, scalar_prefetch = 0 : i64, scratch_operands = 0 : i64, tpu.core_type = #tpu.core_type<tc>, window_params = [{transform_indices = @transform_0, window_bounds = array<i64: 3, 16, 128>}, {transform_indices = @transform_1, window_bounds = array<i64: 3, 16, 128>}, {transform_indices = @transform_2, window_bounds = array<i64: 3, 16, 128>}, {transform_indices = @transform_3, window_bounds = array<i64: 16, 128>}]} {
    %c0_i32 = arith.constant 0 : i32
    %0 = arith.cmpi eq, %arg1, %c0_i32 : i32
    %1 = arith.extui %0 : i1 to i32
    %c0_i32_0 = arith.constant 0 : i32
    %2 = arith.cmpi ne, %1, %c0_i32_0 : i32
    scf.if %2 {
      %cst_31 = arith.constant 0.000000e+00 : f32
      %131 = vector.broadcast %cst_31 : f32 to vector<16x128xf32>
      %c0_32 = arith.constant 0 : index
      %c0_33 = arith.constant 0 : index
      %132 = vector.load %arg5[%c0_32, %c0_33] : memref<16x128xf32, #tpu.memory_space<vmem>>, vector<16x128xf32>
      tpu.vector_store %arg5[%c0_32, %c0_33], %131 {strides = array<i32>} : memref<16x128xf32, #tpu.memory_space<vmem>>, vector<16x128xf32>,
    } else {
    }
    %c0_i32_1 = arith.constant 0 : i32
    %c1_i32 = arith.constant 1 : i32
    %3 = arith.muli %c0_i32_1, %c1_i32 : i32
    %c0_i32_2 = arith.constant 0 : i32
    %4 = arith.addi %c0_i32_2, %3 : i32
    %c16_i32 = arith.constant 16 : i32
    %5 = arith.muli %4, %c16_i32 : i32
    %6 = tpu.assume_multiple %5, 16 : i32
    %c0 = arith.constant 0 : index
    %7 = arith.index_cast %6 : i32 to index
    %c0_3 = arith.constant 0 : index
    %8 = vector.load %arg3[%c0, %7, %c0_3] : memref<3x16x128xf32, #tpu.memory_space<vmem>>, vector<1x16x128xf32>
    %9 = vector.shape_cast %8 : vector<1x16x128xf32> to vector<16x128xf32>
    %c1 = arith.constant 1 : index
    %10 = arith.index_cast %6 : i32 to index
    %c0_4 = arith.constant 0 : index
    %11 = vector.load %arg3[%c1, %10, %c0_4] : memref<3x16x128xf32, #tpu.memory_space<vmem>>, vector<1x16x128xf32>
    %12 = vector.shape_cast %11 : vector<1x16x128xf32> to vector<16x128xf32>
    %c2 = arith.constant 2 : index
    %13 = arith.index_cast %6 : i32 to index
    %c0_5 = arith.constant 0 : index
    %14 = vector.load %arg3[%c2, %13, %c0_5] : memref<3x16x128xf32, #tpu.memory_space<vmem>>, vector<1x16x128xf32>
    %15 = vector.shape_cast %14 : vector<1x16x128xf32> to vector<16x128xf32>
    %16 = math.cos %9 : vector<16x128xf32>
    %17 = math.sin %9 : vector<16x128xf32>
    %18 = math.cos %12 : vector<16x128xf32>
    %19 = math.sin %12 : vector<16x128xf32>
    %20 = math.cos %15 : vector<16x128xf32>
    %21 = math.sin %15 : vector<16x128xf32>
    %22 = arith.mulf %20, %18 : vector<16x128xf32>
    %23 = arith.mulf %21, %18 : vector<16x128xf32>
    %cst = arith.constant 0.000000e+00 : f32
    %24 = vector.broadcast %cst : f32 to vector<16x128xf32>
    %25 = arith.subf %24, %19 : vector<16x128xf32>
    %26 = arith.mulf %19, %16 : vector<16x128xf32>
    %27 = arith.mulf %20, %26 : vector<16x128xf32>
    %28 = arith.mulf %21, %17 : vector<16x128xf32>
    %29 = arith.addf %27, %28 : vector<16x128xf32>
    %30 = arith.mulf %21, %26 : vector<16x128xf32>
    %31 = arith.mulf %20, %17 : vector<16x128xf32>
    %32 = arith.subf %30, %31 : vector<16x128xf32>
    %33 = arith.mulf %18, %16 : vector<16x128xf32>
    %c0_6 = arith.constant 0 : index
    %34 = arith.index_cast %6 : i32 to index
    %c0_7 = arith.constant 0 : index
    %35 = vector.load %arg4[%c0_6, %34, %c0_7] : memref<3x16x128xf32, #tpu.memory_space<vmem>>, vector<1x16x128xf32>
    %36 = vector.shape_cast %35 : vector<1x16x128xf32> to vector<16x128xf32>
    %c1_8 = arith.constant 1 : index
    %37 = arith.index_cast %6 : i32 to index
    %c0_9 = arith.constant 0 : index
    %38 = vector.load %arg4[%c1_8, %37, %c0_9] : memref<3x16x128xf32, #tpu.memory_space<vmem>>, vector<1x16x128xf32>
    %39 = vector.shape_cast %38 : vector<1x16x128xf32> to vector<16x128xf32>
    %c2_10 = arith.constant 2 : index
    %40 = arith.index_cast %6 : i32 to index
    %c0_11 = arith.constant 0 : index
    %41 = vector.load %arg4[%c2_10, %40, %c0_11] : memref<3x16x128xf32, #tpu.memory_space<vmem>>, vector<1x16x128xf32>
    %42 = vector.shape_cast %41 : vector<1x16x128xf32> to vector<16x128xf32>
    %43 = math.cos %36 : vector<16x128xf32>
    %44 = math.sin %36 : vector<16x128xf32>
    %45 = math.cos %39 : vector<16x128xf32>
    %46 = math.sin %39 : vector<16x128xf32>
    %47 = math.cos %42 : vector<16x128xf32>
    %48 = math.sin %42 : vector<16x128xf32>
    %49 = arith.mulf %47, %45 : vector<16x128xf32>
    %50 = arith.mulf %48, %45 : vector<16x128xf32>
    %cst_12 = arith.constant 0.000000e+00 : f32
    %51 = vector.broadcast %cst_12 : f32 to vector<16x128xf32>
    %52 = arith.subf %51, %46 : vector<16x128xf32>
    %53 = arith.mulf %46, %43 : vector<16x128xf32>
    %54 = arith.mulf %47, %53 : vector<16x128xf32>
    %55 = arith.mulf %48, %44 : vector<16x128xf32>
    %56 = arith.addf %54, %55 : vector<16x128xf32>
    %57 = arith.mulf %48, %53 : vector<16x128xf32>
    %58 = arith.mulf %47, %44 : vector<16x128xf32>
    %59 = arith.subf %57, %58 : vector<16x128xf32>
    %60 = arith.mulf %45, %43 : vector<16x128xf32>
    %61 = arith.subf %22, %49 : vector<16x128xf32>
    %62 = arith.subf %23, %50 : vector<16x128xf32>
    %63 = arith.subf %25, %52 : vector<16x128xf32>
    %64 = arith.subf %29, %56 : vector<16x128xf32>
    %65 = arith.subf %32, %59 : vector<16x128xf32>
    %66 = arith.subf %33, %60 : vector<16x128xf32>
    %c0_13 = arith.constant 0 : index
    %67 = arith.index_cast %6 : i32 to index
    %c0_14 = arith.constant 0 : index
    %68 = vector.load %arg2[%c0_13, %67, %c0_14] : memref<3x16x128xf32, #tpu.memory_space<vmem>>, vector<1x16x128xf32>
    %69 = vector.shape_cast %68 : vector<1x16x128xf32> to vector<16x128xf32>
    %cst_15 = arith.constant 5.300000e-02 : f32
    %70 = vector.broadcast %cst_15 : f32 to vector<16x128xf32>
    %71 = arith.mulf %70, %61 : vector<16x128xf32>
    %72 = math.absf %71 : vector<16x128xf32>
    %cst_16 = arith.constant 7.500000e-02 : f32
    %73 = vector.broadcast %cst_16 : f32 to vector<16x128xf32>
    %74 = arith.mulf %73, %64 : vector<16x128xf32>
    %75 = arith.addf %74, %69 : vector<16x128xf32>
    %76 = math.absf %75 : vector<16x128xf32>
    %cst_17 = arith.constant 1.050000e-01 : f32
    %77 = vector.broadcast %cst_17 : f32 to vector<16x128xf32>
    %78 = arith.mulf %77, %64 : vector<16x128xf32>
    %79 = arith.addf %78, %69 : vector<16x128xf32>
    %80 = math.absf %79 : vector<16x128xf32>
    %81 = math.absf %69 : vector<16x128xf32>
    %82 = arith.maximumf %76, %72 : vector<16x128xf32>
    %83 = arith.addf %81, %82 : vector<16x128xf32>
    %84 = arith.maximumf %80, %72 : vector<16x128xf32>
    %85 = arith.addf %83, %84 : vector<16x128xf32>
    %c1_18 = arith.constant 1 : index
    %86 = arith.index_cast %6 : i32 to index
    %c0_19 = arith.constant 0 : index
    %87 = vector.load %arg2[%c1_18, %86, %c0_19] : memref<3x16x128xf32, #tpu.memory_space<vmem>>, vector<1x16x128xf32>
    %88 = vector.shape_cast %87 : vector<1x16x128xf32> to vector<16x128xf32>
    %cst_20 = arith.constant 5.300000e-02 : f32
    %89 = vector.broadcast %cst_20 : f32 to vector<16x128xf32>
    %90 = arith.mulf %89, %62 : vector<16x128xf32>
    %91 = math.absf %90 : vector<16x128xf32>
    %cst_21 = arith.constant 7.500000e-02 : f32
    %92 = vector.broadcast %cst_21 : f32 to vector<16x128xf32>
    %93 = arith.mulf %92, %65 : vector<16x128xf32>
    %94 = arith.addf %93, %88 : vector<16x128xf32>
    %95 = math.absf %94 : vector<16x128xf32>
    %cst_22 = arith.constant 1.050000e-01 : f32
    %96 = vector.broadcast %cst_22 : f32 to vector<16x128xf32>
    %97 = arith.mulf %96, %65 : vector<16x128xf32>
    %98 = arith.addf %97, %88 : vector<16x128xf32>
    %99 = math.absf %98 : vector<16x128xf32>
    %100 = math.absf %88 : vector<16x128xf32>
    %101 = arith.maximumf %95, %91 : vector<16x128xf32>
    %102 = arith.addf %100, %101 : vector<16x128xf32>
    %103 = arith.maximumf %99, %91 : vector<16x128xf32>
    %104 = arith.addf %102, %103 : vector<16x128xf32>
    %105 = arith.addf %85, %104 : vector<16x128xf32>
    %c2_23 = arith.constant 2 : index
    %106 = arith.index_cast %6 : i32 to index
    %c0_24 = arith.constant 0 : index
    %107 = vector.load %arg2[%c2_23, %106, %c0_24] : memref<3x16x128xf32, #tpu.memory_space<vmem>>, vector<1x16x128xf32>
    %108 = vector.shape_cast %107 : vector<1x16x128xf32> to vector<16x128xf32>
    %cst_25 = arith.constant 5.300000e-02 : f32
    %109 = vector.broadcast %cst_25 : f32 to vector<16x128xf32>
    %110 = arith.mulf %109, %63 : vector<16x128xf32>
    %111 = math.absf %110 : vector<16x128xf32>
    %cst_26 = arith.constant 7.500000e-02 : f32
    %112 = vector.broadcast %cst_26 : f32 to vector<16x128xf32>
    %113 = arith.mulf %112, %66 : vector<16x128xf32>
    %114 = arith.addf %113, %108 : vector<16x128xf32>
    %115 = math.absf %114 : vector<16x128xf32>
    %cst_27 = arith.constant 1.050000e-01 : f32
    %116 = vector.broadcast %cst_27 : f32 to vector<16x128xf32>
    %117 = arith.mulf %116, %66 : vector<16x128xf32>
    %118 = arith.addf %117, %108 : vector<16x128xf32>
    %119 = math.absf %118 : vector<16x128xf32>
    %120 = math.absf %108 : vector<16x128xf32>
    %121 = arith.maximumf %115, %111 : vector<16x128xf32>
    %122 = arith.addf %120, %121 : vector<16x128xf32>
    %123 = arith.maximumf %119, %111 : vector<16x128xf32>
    %124 = arith.addf %122, %123 : vector<16x128xf32>
    %125 = arith.addf %105, %124 : vector<16x128xf32>
    %126 = arith.index_cast %6 : i32 to index
    %c0_28 = arith.constant 0 : index
    %127 = vector.load %arg5[%126, %c0_28] : memref<16x128xf32, #tpu.memory_space<vmem>>, vector<16x128xf32>
    %128 = arith.addf %127, %125 : vector<16x128xf32>
    %129 = arith.index_cast %6 : i32 to index
    %c0_29 = arith.constant 0 : index
    %130 = vector.load %arg5[%129, %c0_29] : memref<16x128xf32, #tpu.memory_space<vmem>>, vector<16x128xf32>
    tpu.vector_store %arg5[%129, %c0_29], %128 {strides = array<i32>} : memref<16x128xf32, #tpu.memory_space<vmem>>, vector<16x128xf32>,
    %c1_i32_30 = arith.constant 1 : i32
    return
  }
  func.func @transform_0(%arg0: i32, %arg1: i32) -> (i32, i32, i32) {
    %c1_i32 = arith.constant 1 : i32
    %0 = arith.muli %arg0, %c1_i32 : i32
    %1 = arith.addi %0, %arg1 : i32
    %c0_i32 = arith.constant 0 : i32
    %c0_i32_0 = arith.constant 0 : i32
    %c0_i32_1 = arith.constant 0 : i32
    return %c0_i32, %1, %c0_i32_0 : i32, i32, i32
  }
  func.func @transform_1(%arg0: i32, %arg1: i32) -> (i32, i32, i32) {
    %c1_i32 = arith.constant 1 : i32
    %0 = arith.muli %arg0, %c1_i32 : i32
    %1 = arith.addi %0, %arg1 : i32
    %c0_i32 = arith.constant 0 : i32
    %c0_i32_0 = arith.constant 0 : i32
    %c0_i32_1 = arith.constant 0 : i32
    return %c0_i32, %1, %c0_i32_0 : i32, i32, i32
  }
  func.func @transform_2(%arg0: i32, %arg1: i32) -> (i32, i32, i32) {
    %c1_i32 = arith.constant 1 : i32
    %0 = arith.muli %arg0, %c1_i32 : i32
    %1 = arith.addi %0, %arg1 : i32
    %c0_i32 = arith.constant 0 : i32
    %c0_i32_0 = arith.constant 0 : i32
    %c0_i32_1 = arith.constant 0 : i32
    return %c0_i32, %1, %c0_i32_0 : i32, i32, i32
  }
  func.func @transform_3(%arg0: i32, %arg1: i32) -> (i32, i32) {
    %c0_i32 = arith.constant 0 : i32
    %c0_i32_0 = arith.constant 0 : i32
    return %arg0, %c0_i32 : i32, i32
  }
}

</mosaic_0001>

<llo_original>
// kernel: pose_bc_loss.1
$region0: #{pose_bc_loss.1}
  #allocation0 [shape = 'u32[]', space=smem, size = 0x4, offset = 0x4, fixed_abs, tag = 'smem constant byte address 0x4 - core index']
  #allocation1 [shape = 'u32[144,128]{1,0:T(1,128)}', space=vmem, size = 0x12000, scoped, tag = 'internal scratch']
  %s0 = inlined_call_operand.vmem [shape: f32[3,16,128], index: 0, kind: input, shape index: {}]
  %s1 = inlined_call_operand.vmem [shape: f32[3,16,128], index: 1, kind: input, shape index: {}]
  %s2 = inlined_call_operand.vmem [shape: f32[3,16,128], index: 2, kind: input, shape index: {}]
  %s3 = inlined_call_operand.vmem [shape: f32[16,128], index: 3, kind: output, shape index: {}]
  %s4 = sld [smem:[#allocation0]]
  $region26: #{pose_bc_loss.1} parent=0
    _
  %s6 = ssub.s32 1, %s4
  %s7 = scalar_select 0, %s6, %s4
  // Predicated region
  $region2: #{pose_bc_loss.1} parent=0 // pred_check
    _
  $region3: #{pose_bc_loss.1} parent=0 // pred_check_branch
    %9 = sbr.rel (0) target = $region5
  $region4: #{pose_bc_loss.1} parent=0 // pred_region
    %s10 = sadd.s32 0, 0
    %s11 = smul.u32 2, %s10
    %p12 = scmp.lt.s32.totalorder %s11, 1
    %s13 = scalar_select %p12, %s11, 1
    %s14 = smul.addr %s13, 8
    %s15 = scalar_lea.vmem %s0, %s14
    %s16 = sadd.s32 0, 0
    %s17 = smul.u32 2, %s16
  $region5: #{pose_bc_loss.1} parent=0 // pred_fallthru
    _
  // Predicated region
  $region6: #{pose_bc_loss.1} parent=0 // pred_check
    _
  $region7: #{pose_bc_loss.1} parent=0 // pred_check_branch
    %19 = sbr.rel (0) target = $region9
  $region8: #{pose_bc_loss.1} parent=0 // pred_region
    %s20 = sadd.s32 0, 0
    %s21 = smul.u32 2, %s20
    %p22 = scmp.lt.s32.totalorder %s21, 1
    %s23 = scalar_select %p22, %s21, 1
    %s24 = smul.addr %s23, 8
    %s25 = scalar_lea.vmem %s1, %s24
    %s26 = sadd.s32 0, 0
    %s27 = smul.u32 2, %s26
  $region9: #{pose_bc_loss.1} parent=0 // pred_fallthru
    _
  // Predicated region
  $region10: #{pose_bc_loss.1} parent=0 // pred_check
    _
  $region11: #{pose_bc_loss.1} parent=0 // pred_check_branch
    %29 = sbr.rel (0) target = $region13
  $region12: #{pose_bc_loss.1} parent=0 // pred_region
    %s30 = sadd.s32 0, 0
    %s31 = smul.u32 2, %s30
    %p32 = scmp.lt.s32.totalorder %s31, 1
    %s33 = scalar_select %p32, %s31, 1
    %s34 = smul.addr %s33, 8
    %s35 = scalar_lea.vmem %s2, %s34
    %s36 = sadd.s32 0, 0
    %s37 = smul.u32 2, %s36
  $region13: #{pose_bc_loss.1} parent=0 // pred_fallthru
    _
  %s38 = sadd.s32 0, 0
  %s39 = smul.u32 2, %s38
  %p40 = scmp.lt.s32.totalorder %s39, 1
  %s41 = scalar_select %p40, %s39, 1
  %s42 = smul.addr %s41, 8
  %s43 = scalar_lea.vmem %s0, %s42
  %s44 = sadd.s32 0, 0
  %s45 = smul.u32 2, %s44
  %p46 = scmp.lt.s32.totalorder %s45, 1
  %s47 = scalar_select %p46, %s45, 1
  %s48 = smul.addr %s47, 8
  %s49 = scalar_lea.vmem %s1, %s48
  %s50 = sadd.s32 0, 0
  %s51 = smul.u32 2, %s50
  %p52 = scmp.lt.s32.totalorder %s51, 1
  %s53 = scalar_select %p52, %s51, 1
  %s54 = smul.addr %s53, 8
  %s55 = scalar_lea.vmem %s2, %s54
  %s56 = sadd.s32 0, 0
  %s57 = smul.u32 2, %s56
  %p58 = scmp.lt.s32.totalorder %s57, 1
  %s59 = scalar_select %p58, %s57, 1
  %s60 = smul.addr %s59, 8
  %s61 = scalar_lea.vmem %s0, %s60
  %s62 = sadd.s32 0, 0
  %s63 = smul.u32 2, %s62
  %s64 = sadd.s32 0, 0
  %s65 = smul.u32 2, %s64
  %p66 = scmp.lt.s32.totalorder %s65, 1
  %s67 = scalar_select %p66, %s65, 1
  %s68 = smul.addr %s67, 8
  %s69 = scalar_lea.vmem %s1, %s68
  %s70 = sadd.s32 0, 0
  %s71 = smul.u32 2, %s70
  %s72 = sadd.s32 0, 0
  %s73 = smul.u32 2, %s72
  %p74 = scmp.lt.s32.totalorder %s73, 1
  %s75 = scalar_select %p74, %s73, 1
  %s76 = smul.addr %s75, 8
  %s77 = scalar_lea.vmem %s2, %s76
  %s78 = sadd.s32 0, 0
  %s79 = smul.u32 2, %s78
  %p80 = scmp.eq.s32.totalorder 0, 0
  // Predicated region
  $region14: #{pose_bc_loss.1} parent=0 // pred_check
    %p81 = pneg %p80
  $region15: #{pose_bc_loss.1} parent=0 // pred_check_branch
    %83 = sbr.rel (%p81) target = $region17
  $region16: #{pose_bc_loss.1} parent=0 // pred_region
    %84 = vst [vmem:[%s3] sm:$0xff] 0.0
    %85 = vst [vmem:[%s3 + $0x8] sm:$0xff] 0.0
  $region17: #{pose_bc_loss.1} parent=0 // pred_fallthru
    _
  %v86 = vld [vmem:[%s69] sm:$0xff]
  %v87 = vld [vmem:[%s69 + $0x8] sm:$0xff]
  %s88 = sadd.s32 0, 16
  %s89 = scalar_lea.vmem %s69, %s88
  %v90 = vld [vmem:[%s89] sm:$0xff]
  %v91 = vld [vmem:[%s89 + $0x8] sm:$0xff]
  %s92 = sadd.s32 0, 32
  %s93 = scalar_lea.vmem %s69, %s92
  %v94 = vld [vmem:[%s93] sm:$0xff]
  %v95 = vld [vmem:[%s93 + $0x8] sm:$0xff]
  %v96 = vand.u32 2147483647, %v86
  %vm97 = vcmp.le.f32.partialorder %v96, 0.7853982
  %vm98 = vcmp.lt.s32.totalorder %v86, 0
  %v99 = vand.u32 %v86, 2139095040
  %v100 = vshrl.u32 %v99, 23
  %v101 = vsub.s32 %v100, 127
  %v102 = vand.u32 2147483647, %v86
  %v103 = vand.u32 %v102, 8388607
  %v104 = vor.u32 %v103, 8388608
  %v105 = vsub.s32 0, %v104
  %v106 = vadd.s32 %v101, 1
  %vm107 = vcmp.gt.s32.totalorder %v106, 0
  %v108 = vsel %vm107, %v106, 0
  %v109 = vshrl.u32 %v108, 5
  %v110 = vand.u32 %v108, 31
  %v111 = vsub.s32 32, %v110
  %v112 = vshrl.u32 683565275, %v111
  %v113 = vshll.u32 683565275, %v110
  %v114 = vshrl.u32 2475754826, %v111
  %v115 = vor.u32 %v113, %v114
  %v116 = vshll.u32 2475754826, %v110
  %v117 = vshrl.u32 2131351028, %v111
  %v118 = vor.u32 %v116, %v117
  %v119 = vshll.u32 2131351028, %v110
  %v120 = vshrl.u32 2102212464, %v111
  %v121 = vor.u32 %v119, %v120
  %v122 = vshll.u32 2102212464, %v110
  %v123 = vshrl.u32 920167782, %v111
  %v124 = vor.u32 %v122, %v123
  %v125 = vshll.u32 920167782, %v110
  %v126 = vshrl.u32 1326507024, %v111
  %v127 = vor.u32 %v125, %v126
  %vm128 = vcmp.lt.s32.totalorder %v109, 1
  %vm129 = vcmp.lt.s32.totalorder %v109, 2
  %vm130 = vcmp.lt.s32.totalorder %v109, 3
  %vm131 = vcmp.lt.s32.totalorder %v109, 4
  %v132 = vsel %vm128, %v112, %v115
  %v133 = vsel %vm131, %v121, 2102212464
  %v134 = vsel %vm130, %v118, %v133
  %v135 = vsel %vm129, %v132, %v134
  %v136 = vsel %vm128, %v115, %v118
  %v137 = vsel %vm131, %v124, 920167782
  %v138 = vsel %vm130, %v121, %v137
  %v139 = vsel %vm129, %v136, %v138
  %v140 = vsel %vm128, %v118, %v121
  %v141 = vsel %vm131, %v127, 1326507024
  %v142 = vsel %vm130, %v124, %v141
  %v143 = vsel %vm129, %v140, %v142
  %v144 = vshll.u32 %v104, 8
  %v145 = vmul.u32.u64.compose %v144, %v143
  %v146 = vextract.low.u32 %v145
  %v147 = vextract.high.u32 %v145
  %v148 = vmul.u32.u64.compose %v144, %v139
  %v149 = vextract.low.u32 %v148
  %v150 = vextract.high.u32 %v148
  %v151 = vmul.u32 %v144, %v135
  %v152 = vadd.s32 %v147, %v149
  %vm153 = vc.u32 %v147, %v149
  %v154 = vadd.s32 %v150, 1
  %v155 = vsel %vm153, %v154, %v150
  %v156 = vadd.s32 %v151, %v155
  %v157 = vadd.s32 %v156, 536870912
  %v158 = vshrl.u32 %v157, 30
  %v159 = vshll.u32 %v158, 30
  %v160 = vsub.s32 %v156, %v159
  %vm161 = vcmp.lt.s32.totalorder %v160, 0
  %v162 = vsub.s32 0, %v160
  %v163 = vsel %vm161, %v162, %v160
  %v164 = vclz %v163
  %v165 = vsub.s32 %v164, 2
  %vm166 = vcmp.gt.s32.totalorder 0, %v165
  %v167 = vsel %vm166, 0, %v165
  %v168 = vsub.s32 32, %v167
  %v169 = vshll.u32 %v160, %v167
  %v170 = vshrl.u32 %v152, %v168
  %v171 = vor.u32 %v169, %v170
  %v172 = vsub.s32 4294967266, %v167
  %v173 = vadd.s32 %v172, 127
  %v174 = vshll.u32 %v173, 23
  %v175 = vor.u32 4788187, %v174
  %v176 = vand.u32 2147483647, %v175
  %v178 = vcvt.s32.f32 %v171
  %v179 = vmul.f32 %v178, %v176
  %v180 = vxor.u32 %v179, 2147483648
  %v181 = vsel %vm98, %v180, %v179
  %v182 = vsub.s32 4, %v158
  %v183 = vsel %vm98, %v182, %v158
  %v184 = vsel %vm97, %v86, %v181
  %v185 = vsel %vm97, 0, %v183
  %v186 = vcosq.f32.pop %v184
  %v187 = vsinq.f32.pop %v184
  %vm188 = vweird.f32 %v86
  %v189 = vand.u32 %v185, 3
  %vm190 = vcmp.lt.s32.totalorder %v189, 2
  %vm191 = vcmp.eq.s32.totalorder %v189, 0
  %v192 = vxor.u32 %v187, 2147483648
  %v193 = vsel %vm191, %v186, %v192
  %vm194 = vcmp.eq.s32.totalorder %v189, 2
  %v195 = vxor.u32 %v186, 2147483648
  %v196 = vsel %vm194, %v195, %v187
  %v197 = vsel %vm190, %v193, %v196
  %v198 = vsel %vm188, nan, %v197
  %v199 = vand.u32 2147483647, %v87
  %vm200 = vcmp.le.f32.partialorder %v199, 0.7853982
  %vm201 = vcmp.lt.s32.totalorder %v87, 0
  %v202 = vand.u32 %v87, 2139095040
  %v203 = vshrl.u32 %v202, 23
  %v204 = vsub.s32 %v203, 127
  %v205 = vand.u32 2147483647, %v87
  %v206 = vand.u32 %v205, 8388607
  %v207 = vor.u32 %v206, 8388608
  %v208 = vsub.s32 0, %v207
  %v209 = vadd.s32 %v204, 1
  %vm210 = vcmp.gt.s32.totalorder %v209, 0
  %v211 = vsel %vm210, %v209, 0
  %v212 = vshrl.u32 %v211, 5
  %v213 = vand.u32 %v211, 31
  %v214 = vsub.s32 32, %v213
  %v215 = vshrl.u32 683565275, %v214
  %v216 = vshll.u32 683565275, %v213
  %v217 = vshrl.u32 2475754826, %v214
  %v218 = vor.u32 %v216, %v217
  %v219 = vshll.u32 2475754826, %v213
  %v220 = vshrl.u32 2131351028, %v214
  %v221 = vor.u32 %v219, %v220
  %v222 = vshll.u32 2131351028, %v213
  %v223 = vshrl.u32 2102212464, %v214
  %v224 = vor.u32 %v222, %v223
  %v225 = vshll.u32 2102212464, %v213
  %v226 = vshrl.u32 920167782, %v214
  %v227 = vor.u32 %v225, %v226
  %v228 = vshll.u32 920167782, %v213
  %v229 = vshrl.u32 1326507024, %v214
  %v230 = vor.u32 %v228, %v229
  %vm231 = vcmp.lt.s32.totalorder %v212, 1
  %vm232 = vcmp.lt.s32.totalorder %v212, 2
  %vm233 = vcmp.lt.s32.totalorder %v212, 3
  %vm234 = vcmp.lt.s32.totalorder %v212, 4
  %v235 = vsel %vm231, %v215, %v218
  %v236 = vsel %vm234, %v224, 2102212464
  %v237 = vsel %vm233, %v221, %v236
  %v238 = vsel %vm232, %v235, %v237
  %v239 = vsel %vm231, %v218, %v221
  %v240 = vsel %vm234, %v227, 920167782
  %v241 = vsel %vm233, %v224, %v240
  %v242 = vsel %vm232, %v239, %v241
  %v243 = vsel %vm231, %v221, %v224
  %v244 = vsel %vm234, %v230, 1326507024
  %v245 = vsel %vm233, %v227, %v244
  %v246 = vsel %vm232, %v243, %v245
  %v247 = vshll.u32 %v207, 8
  %v248 = vmul.u32.u64.compose %v247, %v246
  %v249 = vextract.low.u32 %v248
  %v250 = vextract.high.u32 %v248
  %v251 = vmul.u32.u64.compose %v247, %v242
  %v252 = vextract.low.u32 %v251
  %v253 = vextract.high.u32 %v251
  %v254 = vmul.u32 %v247, %v238
  %v255 = vadd.s32 %v250, %v252
  %vm256 = vc.u32 %v250, %v252
  %v257 = vadd.s32 %v253, 1
  %v258 = vsel %vm256, %v257, %v253
  %v259 = vadd.s32 %v254, %v258
  %v260 = vadd.s32 %v259, 536870912
  %v261 = vshrl.u32 %v260, 30
  %v262 = vshll.u32 %v261, 30
  %v263 = vsub.s32 %v259, %v262
  %vm264 = vcmp.lt.s32.totalorder %v263, 0
  %v265 = vsub.s32 0, %v263
  %v266 = vsel %vm264, %v265, %v263
  %v267 = vclz %v266
  %v268 = vsub.s32 %v267, 2
  %vm269 = vcmp.gt.s32.totalorder 0, %v268
  %v270 = vsel %vm269, 0, %v268
  %v271 = vsub.s32 32, %v270
  %v272 = vshll.u32 %v263, %v270
  %v273 = vshrl.u32 %v255, %v271
  %v274 = vor.u32 %v272, %v273
  %v275 = vsub.s32 4294967266, %v270
  %v276 = vadd.s32 %v275, 127
  %v277 = vshll.u32 %v276, 23
  %v278 = vor.u32 4788187, %v277
  %v279 = vand.u32 2147483647, %v278
  %v281 = vcvt.s32.f32 %v274
  %v282 = vmul.f32 %v281, %v279
  %v283 = vxor.u32 %v282, 2147483648
  %v284 = vsel %vm201, %v283, %v282
  %v285 = vsub.s32 4, %v261
  %v286 = vsel %vm201, %v285, %v261
  %v287 = vsel %vm200, %v87, %v284
  %v288 = vsel %vm200, 0, %v286
  %v289 = vcosq.f32.pop %v287
  %v290 = vsinq.f32.pop %v287
  %vm291 = vweird.f32 %v87
  %v292 = vand.u32 %v288, 3
  %vm293 = vcmp.lt.s32.totalorder %v292, 2
  %vm294 = vcmp.eq.s32.totalorder %v292, 0
  %v295 = vxor.u32 %v290, 2147483648
  %v296 = vsel %vm294, %v289, %v295
  %vm297 = vcmp.eq.s32.totalorder %v292, 2
  %v298 = vxor.u32 %v289, 2147483648
  %v299 = vsel %vm297, %v298, %v290
  %v300 = vsel %vm293, %v296, %v299
  %v301 = vsel %vm291, nan, %v300
  %v302 = vand.u32 2147483647, %v86
  %vm303 = vcmp.le.f32.partialorder %v302, 0.7853982
  %vm304 = vcmp.lt.s32.totalorder %v86, 0
  %v305 = vand.u32 %v86, 2139095040
  %v306 = vshrl.u32 %v305, 23
  %v307 = vsub.s32 %v306, 127
  %v308 = vand.u32 2147483647, %v86
  %v309 = vand.u32 %v308, 8388607
  %v310 = vor.u32 %v309, 8388608
  %v311 = vsub.s32 0, %v310
  %v312 = vadd.s32 %v307, 1
  %vm313 = vcmp.gt.s32.totalorder %v312, 0
  %v314 = vsel %vm313, %v312, 0
  %v315 = vshrl.u32 %v314, 5
  %v316 = vand.u32 %v314, 31
  %v317 = vsub.s32 32, %v316
  %v318 = vshrl.u32 683565275, %v317
  %v319 = vshll.u32 683565275, %v316
  %v320 = vshrl.u32 2475754826, %v317
  %v321 = vor.u32 %v319, %v320
  %v322 = vshll.u32 2475754826, %v316
  %v323 = vshrl.u32 2131351028, %v317
  %v324 = vor.u32 %v322, %v323
  %v325 = vshll.u32 2131351028, %v316
  %v326 = vshrl.u32 2102212464, %v317
  %v327 = vor.u32 %v325, %v326
  %v328 = vshll.u32 2102212464, %v316
  %v329 = vshrl.u32 920167782, %v317
  %v330 = vor.u32 %v328, %v329
  %v331 = vshll.u32 920167782, %v316
  %v332 = vshrl.u32 1326507024, %v317
  %v333 = vor.u32 %v331, %v332
  %vm334 = vcmp.lt.s32.totalorder %v315, 1
  %vm335 = vcmp.lt.s32.totalorder %v315, 2
  %vm336 = vcmp.lt.s32.totalorder %v315, 3
  %vm337 = vcmp.lt.s32.totalorder %v315, 4
  %v338 = vsel %vm334, %v318, %v321
  %v339 = vsel %vm337, %v327, 2102212464
  %v340 = vsel %vm336, %v324, %v339
  %v341 = vsel %vm335, %v338, %v340
  %v342 = vsel %vm334, %v321, %v324
  %v343 = vsel %vm337, %v330, 920167782
  %v344 = vsel %vm336, %v327, %v343
  %v345 = vsel %vm335, %v342, %v344
  %v346 = vsel %vm334, %v324, %v327
  %v347 = vsel %vm337, %v333, 1326507024
  %v348 = vsel %vm336, %v330, %v347
  %v349 = vsel %vm335, %v346, %v348
  %v350 = vshll.u32 %v310, 8
  %v351 = vmul.u32.u64.compose %v350, %v349
  %v352 = vextract.low.u32 %v351
  %v353 = vextract.high.u32 %v351
  %v354 = vmul.u32.u64.compose %v350, %v345
  %v355 = vextract.low.u32 %v354
  %v356 = vextract.high.u32 %v354
  %v357 = vmul.u32 %v350, %v341
  %v358 = vadd.s32 %v353, %v355
  %vm359 = vc.u32 %v353, %v355
  %v360 = vadd.s32 %v356, 1
  %v361 = vsel %vm359, %v360, %v356
  %v362 = vadd.s32 %v357, %v361
  %v363 = vadd.s32 %v362, 536870912
  %v364 = vshrl.u32 %v363, 30
  %v365 = vshll.u32 %v364, 30
  %v366 = vsub.s32 %v362, %v365
  %vm367 = vcmp.lt.s32.totalorder %v366, 0
  %v368 = vsub.s32 0, %v366
  %v369 = vsel %vm367, %v368, %v366
  %v370 = vclz %v369
  %v371 = vsub.s32 %v370, 2
  %vm372 = vcmp.gt.s32.totalorder 0, %v371
  %v373 = vsel %vm372, 0, %v371
  %v374 = vsub.s32 32, %v373
  %v375 = vshll.u32 %v366, %v373
  %v376 = vshrl.u32 %v358, %v374
  %v377 = vor.u32 %v375, %v376
  %v378 = vsub.s32 4294967266, %v373
  %v379 = vadd.s32 %v378, 127
  %v380 = vshll.u32 %v379, 23
  %v381 = vor.u32 4788187, %v380
  %v382 = vand.u32 2147483647, %v381
  %v384 = vcvt.s32.f32 %v377
  %v385 = vmul.f32 %v384, %v382
  %v386 = vxor.u32 %v385, 2147483648
  %v387 = vsel %vm304, %v386, %v385
  %v388 = vsub.s32 4, %v364
  %v389 = vsel %vm304, %v388, %v364
  %v390 = vsel %vm303, %v86, %v387
  %v391 = vsel %vm303, 0, %v389
  %v392 = vcosq.f32.pop %v390
  %v393 = vsinq.f32.pop %v390
  %vm394 = vweird.f32 %v86
  %v395 = vadd.s32 %v391, 3
  %v396 = vand.u32 %v395, 3
  %vm397 = vcmp.lt.s32.totalorder %v396, 2
  %vm398 = vcmp.eq.s32.totalorder %v396, 0
  %v399 = vxor.u32 %v393, 2147483648
  %v400 = vsel %vm398, %v392, %v399
  %vm401 = vcmp.eq.s32.totalorder %v396, 2
  %v402 = vxor.u32 %v392, 2147483648
  %v403 = vsel %vm401, %v402, %v393
  %v404 = vsel %vm397, %v400, %v403
  %v405 = vsel %vm394, nan, %v404
  %v406 = vand.u32 2147483647, %v87
  %vm407 = vcmp.le.f32.partialorder %v406, 0.7853982
  %vm408 = vcmp.lt.s32.totalorder %v87, 0
  %v409 = vand.u32 %v87, 2139095040
  %v410 = vshrl.u32 %v409, 23
  %v411 = vsub.s32 %v410, 127
  %v412 = vand.u32 2147483647, %v87
  %v413 = vand.u32 %v412, 8388607
  %v414 = vor.u32 %v413, 8388608
  %v415 = vsub.s32 0, %v414
  %v416 = vadd.s32 %v411, 1
  %vm417 = vcmp.gt.s32.totalorder %v416, 0
  %v418 = vsel %vm417, %v416, 0
  %v419 = vshrl.u32 %v418, 5
  %v420 = vand.u32 %v418, 31
  %v421 = vsub.s32 32, %v420
  %v422 = vshrl.u32 683565275, %v421
  %v423 = vshll.u32 683565275, %v420
  %v424 = vshrl.u32 2475754826, %v421
  %v425 = vor.u32 %v423, %v424
  %v426 = vshll.u32 2475754826, %v420
  %v427 = vshrl.u32 2131351028, %v421
  %v428 = vor.u32 %v426, %v427
  %v429 = vshll.u32 2131351028, %v420
  %v430 = vshrl.u32 2102212464, %v421
  %v431 = vor.u32 %v429, %v430
  %v432 = vshll.u32 2102212464, %v420
  %v433 = vshrl.u32 920167782, %v421
  %v434 = vor.u32 %v432, %v433
  %v435 = vshll.u32 920167782, %v420
  %v436 = vshrl.u32 1326507024, %v421
  %v437 = vor.u32 %v435, %v436
  %vm438 = vcmp.lt.s32.totalorder %v419, 1
  %vm439 = vcmp.lt.s32.totalorder %v419, 2
  %vm440 = vcmp.lt.s32.totalorder %v419, 3
  %vm441 = vcmp.lt.s32.totalorder %v419, 4
  %v442 = vsel %vm438, %v422, %v425
  %v443 = vsel %vm441, %v431, 2102212464
  %v444 = vsel %vm440, %v428, %v443
  %v445 = vsel %vm439, %v442, %v444
  %v446 = vsel %vm438, %v425, %v428
  %v447 = vsel %vm441, %v434, 920167782
  %v448 = vsel %vm440, %v431, %v447
  %v449 = vsel %vm439, %v446, %v448
  %v450 = vsel %vm438, %v428, %v431
  %v451 = vsel %vm441, %v437, 1326507024
  %v452 = vsel %vm440, %v434, %v451
  %v453 = vsel %vm439, %v450, %v452
  %v454 = vshll.u32 %v414, 8
  %v455 = vmul.u32.u64.compose %v454, %v453
  %v456 = vextract.low.u32 %v455
  %v457 = vextract.high.u32 %v455
  %v458 = vmul.u32.u64.compose %v454, %v449
  %v459 = vextract.low.u32 %v458
  %v460 = vextract.high.u32 %v458
  %v461 = vmul.u32 %v454, %v445
  %v462 = vadd.s32 %v457, %v459
  %vm463 = vc.u32 %v457, %v459
  %v464 = vadd.s32 %v460, 1
  %v465 = vsel %vm463, %v464, %v460
  %v466 = vadd.s32 %v461, %v465
  %v467 = vadd.s32 %v466, 536870912
  %v468 = vshrl.u32 %v467, 30
  %v469 = vshll.u32 %v468, 30
  %v470 = vsub.s32 %v466, %v469
  %vm471 = vcmp.lt.s32.totalorder %v470, 0
  %v472 = vsub.s32 0, %v470
  %v473 = vsel %vm471, %v472, %v470
  %v474 = vclz %v473
  %v475 = vsub.s32 %v474, 2
  %vm476 = vcmp.gt.s32.totalorder 0, %v475
  %v477 = vsel %vm476, 0, %v475
  %v478 = vsub.s32 32, %v477
  %v479 = vshll.u32 %v470, %v477
  %v480 = vshrl.u32 %v462, %v478
  %v481 = vor.u32 %v479, %v480
  %v482 = vsub.s32 4294967266, %v477
  %v483 = vadd.s32 %v482, 127
  %v484 = vshll.u32 %v483, 23
  %v485 = vor.u32 4788187, %v484
  %v486 = vand.u32 2147483647, %v485
  %v488 = vcvt.s32.f32 %v481
  %v489 = vmul.f32 %v488, %v486
  %v490 = vxor.u32 %v489, 2147483648
  %v491 = vsel %vm408, %v490, %v489
  %v492 = vsub.s32 4, %v468
  %v493 = vsel %vm408, %v492, %v468
  %v494 = vsel %vm407, %v87, %v491
  %v495 = vsel %vm407, 0, %v493
  %v496 = vcosq.f32.pop %v494
  %v497 = vsinq.f32.pop %v494
  %vm498 = vweird.f32 %v87
  %v499 = vadd.s32 %v495, 3
  %v500 = vand.u32 %v499, 3
  %vm501 = vcmp.lt.s32.totalorder %v500, 2
  %vm502 = vcmp.eq.s32.totalorder %v500, 0
  %v503 = vxor.u32 %v497, 2147483648
  %v504 = vsel %vm502, %v496, %v503
  %vm505 = vcmp.eq.s32.totalorder %v500, 2
  %v506 = vxor.u32 %v496, 2147483648
  %v507 = vsel %vm505, %v506, %v497
  %v508 = vsel %vm501, %v504, %v507
  %v509 = vsel %vm498, nan, %v508
  %v510 = vand.u32 2147483647, %v90
  %vm511 = vcmp.le.f32.partialorder %v510, 0.7853982
  %vm512 = vcmp.lt.s32.totalorder %v90, 0
  %v513 = vand.u32 %v90, 2139095040
  %v514 = vshrl.u32 %v513, 23
  %v515 = vsub.s32 %v514, 127
  %v516 = vand.u32 2147483647, %v90
  %v517 = vand.u32 %v516, 8388607
  %v518 = vor.u32 %v517, 8388608
  %v519 = vsub.s32 0, %v518
  %v520 = vadd.s32 %v515, 1
  %vm521 = vcmp.gt.s32.totalorder %v520, 0
  %v522 = vsel %vm521, %v520, 0
  %v523 = vshrl.u32 %v522, 5
  %v524 = vand.u32 %v522, 31
  %v525 = vsub.s32 32, %v524
  %v526 = vshrl.u32 683565275, %v525
  %v527 = vshll.u32 683565275, %v524
  %v528 = vshrl.u32 2475754826, %v525
  %v529 = vor.u32 %v527, %v528
  %v530 = vshll.u32 2475754826, %v524
  %v531 = vshrl.u32 2131351028, %v525
  %v532 = vor.u32 %v530, %v531
  %v533 = vshll.u32 2131351028, %v524
  %v534 = vshrl.u32 2102212464, %v525
  %v535 = vor.u32 %v533, %v534
  %v536 = vshll.u32 2102212464, %v524
  %v537 = vshrl.u32 920167782, %v525
  %v538 = vor.u32 %v536, %v537
  %v539 = vshll.u32 920167782, %v524
  %v540 = vshrl.u32 1326507024, %v525
  %v541 = vor.u32 %v539, %v540
  %vm542 = vcmp.lt.s32.totalorder %v523, 1
  %vm543 = vcmp.lt.s32.totalorder %v523, 2
  %vm544 = vcmp.lt.s32.totalorder %v523, 3
  %vm545 = vcmp.lt.s32.totalorder %v523, 4
  %v546 = vsel %vm542, %v526, %v529
  %v547 = vsel %vm545, %v535, 2102212464
  %v548 = vsel %vm544, %v532, %v547
  %v549 = vsel %vm543, %v546, %v548
  %v550 = vsel %vm542, %v529, %v532
  %v551 = vsel %vm545, %v538, 920167782
  %v552 = vsel %vm544, %v535, %v551
  %v553 = vsel %vm543, %v550, %v552
  %v554 = vsel %vm542, %v532, %v535
  %v555 = vsel %vm545, %v541, 1326507024
  %v556 = vsel %vm544, %v538, %v555
  %v557 = vsel %vm543, %v554, %v556
  %v558 = vshll.u32 %v518, 8
  %v559 = vmul.u32.u64.compose %v558, %v557
  %v560 = vextract.low.u32 %v559
  %v561 = vextract.high.u32 %v559
  %v562 = vmul.u32.u64.compose %v558, %v553
  %v563 = vextract.low.u32 %v562
  %v564 = vextract.high.u32 %v562
  %v565 = vmul.u32 %v558, %v549
  %v566 = vadd.s32 %v561, %v563
  %vm567 = vc.u32 %v561, %v563
  %v568 = vadd.s32 %v564, 1
  %v569 = vsel %vm567, %v568, %v564
  %v570 = vadd.s32 %v565, %v569
  %v571 = vadd.s32 %v570, 536870912
  %v572 = vshrl.u32 %v571, 30
  %v573 = vshll.u32 %v572, 30
  %v574 = vsub.s32 %v570, %v573
  %vm575 = vcmp.lt.s32.totalorder %v574, 0
  %v576 = vsub.s32 0, %v574
  %v577 = vsel %vm575, %v576, %v574
  %v578 = vclz %v577
  %v579 = vsub.s32 %v578, 2
  %vm580 = vcmp.gt.s32.totalorder 0, %v579
  %v581 = vsel %vm580, 0, %v579
  %v582 = vsub.s32 32, %v581
  %v583 = vshll.u32 %v574, %v581
  %v584 = vshrl.u32 %v566, %v582
  %v585 = vor.u32 %v583, %v584
  %v586 = vsub.s32 4294967266, %v581
  %v587 = vadd.s32 %v586, 127
  %v588 = vshll.u32 %v587, 23
  %v589 = vor.u32 4788187, %v588
  %v590 = vand.u32 2147483647, %v589
  %v592 = vcvt.s32.f32 %v585
  %v593 = vmul.f32 %v592, %v590
  %v594 = vxor.u32 %v593, 2147483648
  %v595 = vsel %vm512, %v594, %v593
  %v596 = vsub.s32 4, %v572
  %v597 = vsel %vm512, %v596, %v572
  %v598 = vsel %vm511, %v90, %v595
  %v599 = vsel %vm511, 0, %v597
  %v600 = vcosq.f32.pop %v598
  %v601 = vsinq.f32.pop %v598
  %vm602 = vweird.f32 %v90
  %v603 = vand.u32 %v599, 3
  %vm604 = vcmp.lt.s32.totalorder %v603, 2
  %vm605 = vcmp.eq.s32.totalorder %v603, 0
  %v606 = vxor.u32 %v601, 2147483648
  %v607 = vsel %vm605, %v600, %v606
  %vm608 = vcmp.eq.s32.totalorder %v603, 2
  %v609 = vxor.u32 %v600, 2147483648
  %v610 = vsel %vm608, %v609, %v601
  %v611 = vsel %vm604, %v607, %v610
  %v612 = vsel %vm602, nan, %v611
  %v613 = vand.u32 2147483647, %v91
  %vm614 = vcmp.le.f32.partialorder %v613, 0.7853982
  %vm615 = vcmp.lt.s32.totalorder %v91, 0
  %v616 = vand.u32 %v91, 2139095040
  %v617 = vshrl.u32 %v616, 23
  %v618 = vsub.s32 %v617, 127
  %v619 = vand.u32 2147483647, %v91
  %v620 = vand.u32 %v619, 8388607
  %v621 = vor.u32 %v620, 8388608
  %v622 = vsub.s32 0, %v621
  %v623 = vadd.s32 %v618, 1
  %vm624 = vcmp.gt.s32.totalorder %v623, 0
  %v625 = vsel %vm624, %v623, 0
  %v626 = vshrl.u32 %v625, 5
  %v627 = vand.u32 %v625, 31
  %v628 = vsub.s32 32, %v627
  %v629 = vshrl.u32 683565275, %v628
  %v630 = vshll.u32 683565275, %v627
  %v631 = vshrl.u32 2475754826, %v628
  %v632 = vor.u32 %v630, %v631
  %v633 = vshll.u32 2475754826, %v627
  %v634 = vshrl.u32 2131351028, %v628
  %v635 = vor.u32 %v633, %v634
  %v636 = vshll.u32 2131351028, %v627
  %v637 = vshrl.u32 2102212464, %v628
  %v638 = vor.u32 %v636, %v637
  %v639 = vshll.u32 2102212464, %v627
  %v640 = vshrl.u32 920167782, %v628
  %v641 = vor.u32 %v639, %v640
  %v642 = vshll.u32 920167782, %v627
  %v643 = vshrl.u32 1326507024, %v628
  %v644 = vor.u32 %v642, %v643
  %vm645 = vcmp.lt.s32.totalorder %v626, 1
  %vm646 = vcmp.lt.s32.totalorder %v626, 2
  %vm647 = vcmp.lt.s32.totalorder %v626, 3
  %vm648 = vcmp.lt.s32.totalorder %v626, 4
  %v649 = vsel %vm645, %v629, %v632
  %v650 = vsel %vm648, %v638, 2102212464
  %v651 = vsel %vm647, %v635, %v650
  %v652 = vsel %vm646, %v649, %v651
  %v653 = vsel %vm645, %v632, %v635
  %v654 = vsel %vm648, %v641, 920167782
  %v655 = vsel %vm647, %v638, %v654
  %v656 = vsel %vm646, %v653, %v655
  %v657 = vsel %vm645, %v635, %v638
  %v658 = vsel %vm648, %v644, 1326507024
  %v659 = vsel %vm647, %v641, %v658
  %v660 = vsel %vm646, %v657, %v659
  %v661 = vshll.u32 %v621, 8
  %v662 = vmul.u32.u64.compose %v661, %v660
  %v663 = vextract.low.u32 %v662
  %v664 = vextract.high.u32 %v662
  %v665 = vmul.u32.u64.compose %v661, %v656
  %v666 = vextract.low.u32 %v665
  %v667 = vextract.high.u32 %v665
  %v668 = vmul.u32 %v661, %v652
  %v669 = vadd.s32 %v664, %v666
  %vm670 = vc.u32 %v664, %v666
  %v671 = vadd.s32 %v667, 1
  %v672 = vsel %vm670, %v671, %v667
  %v673 = vadd.s32 %v668, %v672
  %v674 = vadd.s32 %v673, 536870912
  %v675 = vshrl.u32 %v674, 30
  %v676 = vshll.u32 %v675, 30
  %v677 = vsub.s32 %v673, %v676
  %vm678 = vcmp.lt.s32.totalorder %v677, 0
  %v679 = vsub.s32 0, %v677
  %v680 = vsel %vm678, %v679, %v677
  %v681 = vclz %v680
  %v682 = vsub.s32 %v681, 2
  %vm683 = vcmp.gt.s32.totalorder 0, %v682
  %v684 = vsel %vm683, 0, %v682
  %v685 = vsub.s32 32, %v684
  %v686 = vshll.u32 %v677, %v684
  %v687 = vshrl.u32 %v669, %v685
  %v688 = vor.u32 %v686, %v687
  %v689 = vsub.s32 4294967266, %v684
  %v690 = vadd.s32 %v689, 127
  %v691 = vshll.u32 %v690, 23
  %v692 = vor.u32 4788187, %v691
  %v693 = vand.u32 2147483647, %v692
  %v695 = vcvt.s32.f32 %v688
  %v696 = vmul.f32 %v695, %v693
  %v697 = vxor.u32 %v696, 2147483648
  %v698 = vsel %vm615, %v697, %v696
  %v699 = vsub.s32 4, %v675
  %v700 = vsel %vm615, %v699, %v675
  %v701 = vsel %vm614, %v91, %v698
  %v702 = vsel %vm614, 0, %v700
  %v703 = vcosq.f32.pop %v701
  %v704 = vsinq.f32.pop %v701
  %vm705 = vweird.f32 %v91
  %v706 = vand.u32 %v702, 3
  %vm707 = vcmp.lt.s32.totalorder %v706, 2
  %vm708 = vcmp.eq.s32.totalorder %v706, 0
  %v709 = vxor.u32 %v704, 2147483648
  %v710 = vsel %vm708, %v703, %v709
  %vm711 = vcmp.eq.s32.totalorder %v706, 2
  %v712 = vxor.u32 %v703, 2147483648
  %v713 = vsel %vm711, %v712, %v704
  %v714 = vsel %vm707, %v710, %v713
  %v715 = vsel %vm705, nan, %v714
  %v716 = vand.u32 2147483647, %v90
  %vm717 = vcmp.le.f32.partialorder %v716, 0.7853982
  %vm718 = vcmp.lt.s32.totalorder %v90, 0
  %v719 = vand.u32 %v90, 2139095040
  %v720 = vshrl.u32 %v719, 23
  %v721 = vsub.s32 %v720, 127
  %v722 = vand.u32 2147483647, %v90
  %v723 = vand.u32 %v722, 8388607
  %v724 = vor.u32 %v723, 8388608
  %v725 = vsub.s32 0, %v724
  %v726 = vadd.s32 %v721, 1
  %vm727 = vcmp.gt.s32.totalorder %v726, 0
  %v728 = vsel %vm727, %v726, 0
  %v729 = vshrl.u32 %v728, 5
  %v730 = vand.u32 %v728, 31
  %v731 = vsub.s32 32, %v730
  %v732 = vshrl.u32 683565275, %v731
  %v733 = vshll.u32 683565275, %v730
  %v734 = vshrl.u32 2475754826, %v731
  %v735 = vor.u32 %v733, %v734
  %v736 = vshll.u32 2475754826, %v730
  %v737 = vshrl.u32 2131351028, %v731
  %v738 = vor.u32 %v736, %v737
  %v739 = vshll.u32 2131351028, %v730
  %v740 = vshrl.u32 2102212464, %v731
  %v741 = vor.u32 %v739, %v740
  %v742 = vshll.u32 2102212464, %v730
  %v743 = vshrl.u32 920167782, %v731
  %v744 = vor.u32 %v742, %v743
  %v745 = vshll.u32 920167782, %v730
  %v746 = vshrl.u32 1326507024, %v731
  %v747 = vor.u32 %v745, %v746
  %vm748 = vcmp.lt.s32.totalorder %v729, 1
  %vm749 = vcmp.lt.s32.totalorder %v729, 2
  %vm750 = vcmp.lt.s32.totalorder %v729, 3
  %vm751 = vcmp.lt.s32.totalorder %v729, 4
  %v752 = vsel %vm748, %v732, %v735
  %v753 = vsel %vm751, %v741, 2102212464
  %v754 = vsel %vm750, %v738, %v753
  %v755 = vsel %vm749, %v752, %v754
  %v756 = vsel %vm748, %v735, %v738
  %v757 = vsel %vm751, %v744, 920167782
  %v758 = vsel %vm750, %v741, %v757
  %v759 = vsel %vm749, %v756, %v758
  %v760 = vsel %vm748, %v738, %v741
  %v761 = vsel %vm751, %v747, 1326507024
  %v762 = vsel %vm750, %v744, %v761
  %v763 = vsel %vm749, %v760, %v762
  %v764 = vshll.u32 %v724, 8
  %v765 = vmul.u32.u64.compose %v764, %v763
  %v766 = vextract.low.u32 %v765
  %v767 = vextract.high.u32 %v765
  %v768 = vmul.u32.u64.compose %v764, %v759
  %v769 = vextract.low.u32 %v768
  %v770 = vextract.high.u32 %v768
  %v771 = vmul.u32 %v764, %v755
  %v772 = vadd.s32 %v767, %v769
  %vm773 = vc.u32 %v767, %v769
  %v774 = vadd.s32 %v770, 1
  %v775 = vsel %vm773, %v774, %v770
  %v776 = vadd.s32 %v771, %v775
  %v777 = vadd.s32 %v776, 536870912
  %v778 = vshrl.u32 %v777, 30
  %v779 = vshll.u32 %v778, 30
  %v780 = vsub.s32 %v776, %v779
  %vm781 = vcmp.lt.s32.totalorder %v780, 0
  %v782 = vsub.s32 0, %v780
  %v783 = vsel %vm781, %v782, %v780
  %v784 = vclz %v783
  %v785 = vsub.s32 %v784, 2
  %vm786 = vcmp.gt.s32.totalorder 0, %v785
  %v787 = vsel %vm786, 0, %v785
  %v788 = vsub.s32 32, %v787
  %v789 = vshll.u32 %v780, %v787
  %v790 = vshrl.u32 %v772, %v788
  %v791 = vor.u32 %v789, %v790
  %v792 = vsub.s32 4294967266, %v787
  %v793 = vadd.s32 %v792, 127
  %v794 = vshll.u32 %v793, 23
  %v795 = vor.u32 4788187, %v794
  %v796 = vand.u32 2147483647, %v795
  %v798 = vcvt.s32.f32 %v791
  %v799 = vmul.f32 %v798, %v796
  %v800 = vxor.u32 %v799, 2147483648
  %v801 = vsel %vm718, %v800, %v799
  %v802 = vsub.s32 4, %v778
  %v803 = vsel %vm718, %v802, %v778
  %v804 = vsel %vm717, %v90, %v801
  %v805 = vsel %vm717, 0, %v803
  %v806 = vcosq.f32.pop %v804
  %v807 = vsinq.f32.pop %v804
  %vm808 = vweird.f32 %v90
  %v809 = vadd.s32 %v805, 3
  %v810 = vand.u32 %v809, 3
  %vm811 = vcmp.lt.s32.totalorder %v810, 2
  %vm812 = vcmp.eq.s32.totalorder %v810, 0
  %v813 = vxor.u32 %v807, 2147483648
  %v814 = vsel %vm812, %v806, %v813
  %vm815 = vcmp.eq.s32.totalorder %v810, 2
  %v816 = vxor.u32 %v806, 2147483648
  %v817 = vsel %vm815, %v816, %v807
  %v818 = vsel %vm811, %v814, %v817
  %v819 = vsel %vm808, nan, %v818
  %v820 = vand.u32 2147483647, %v91
  %vm821 = vcmp.le.f32.partialorder %v820, 0.7853982
  %vm822 = vcmp.lt.s32.totalorder %v91, 0
  %v823 = vand.u32 %v91, 2139095040
  %v824 = vshrl.u32 %v823, 23
  %v825 = vsub.s32 %v824, 127
  %v826 = vand.u32 2147483647, %v91
  %v827 = vand.u32 %v826, 8388607
  %v828 = vor.u32 %v827, 8388608
  %v829 = vsub.s32 0, %v828
  %v830 = vadd.s32 %v825, 1
  %vm831 = vcmp.gt.s32.totalorder %v830, 0
  %v832 = vsel %vm831, %v830, 0
  %v833 = vshrl.u32 %v832, 5
  %v834 = vand.u32 %v832, 31
  %v835 = vsub.s32 32, %v834
  %v836 = vshrl.u32 683565275, %v835
  %v837 = vshll.u32 683565275, %v834
  %v838 = vshrl.u32 2475754826, %v835
  %v839 = vor.u32 %v837, %v838
  %v840 = vshll.u32 2475754826, %v834
  %v841 = vshrl.u32 2131351028, %v835
  %v842 = vor.u32 %v840, %v841
  %v843 = vshll.u32 2131351028, %v834
  %v844 = vshrl.u32 2102212464, %v835
  %v845 = vor.u32 %v843, %v844
  %v846 = vshll.u32 2102212464, %v834
  %v847 = vshrl.u32 920167782, %v835
  %v848 = vor.u32 %v846, %v847
  %v849 = vshll.u32 920167782, %v834
  %v850 = vshrl.u32 1326507024, %v835
  %v851 = vor.u32 %v849, %v850
  %vm852 = vcmp.lt.s32.totalorder %v833, 1
  %vm853 = vcmp.lt.s32.totalorder %v833, 2
  %vm854 = vcmp.lt.s32.totalorder %v833, 3
  %vm855 = vcmp.lt.s32.totalorder %v833, 4
  %v856 = vsel %vm852, %v836, %v839
  %v857 = vsel %vm855, %v845, 2102212464
  %v858 = vsel %vm854, %v842, %v857
  %v859 = vsel %vm853, %v856, %v858
  %v860 = vsel %vm852, %v839, %v842
  %v861 = vsel %vm855, %v848, 920167782
  %v862 = vsel %vm854, %v845, %v861
  %v863 = vsel %vm853, %v860, %v862
  %v864 = vsel %vm852, %v842, %v845
  %v865 = vsel %vm855, %v851, 1326507024
  %v866 = vsel %vm854, %v848, %v865
  %v867 = vsel %vm853, %v864, %v866
  %v868 = vshll.u32 %v828, 8
  %v869 = vmul.u32.u64.compose %v868, %v867
  %v870 = vextract.low.u32 %v869
  %v871 = vextract.high.u32 %v869
  %v872 = vmul.u32.u64.compose %v868, %v863
  %v873 = vextract.low.u32 %v872
  %v874 = vextract.high.u32 %v872
  %v875 = vmul.u32 %v868, %v859
  %v876 = vadd.s32 %v871, %v873
  %vm877 = vc.u32 %v871, %v873
  %v878 = vadd.s32 %v874, 1
  %v879 = vsel %vm877, %v878, %v874
  %v880 = vadd.s32 %v875, %v879
  %v881 = vadd.s32 %v880, 536870912
  %v882 = vshrl.u32 %v881, 30
  %v883 = vshll.u32 %v882, 30
  %v884 = vsub.s32 %v880, %v883
  %vm885 = vcmp.lt.s32.totalorder %v884, 0
  %v886 = vsub.s32 0, %v884
  %v887 = vsel %vm885, %v886, %v884
  %v888 = vclz %v887
  %v889 = vsub.s32 %v888, 2
  %vm890 = vcmp.gt.s32.totalorder 0, %v889
  %v891 = vsel %vm890, 0, %v889
  %v892 = vsub.s32 32, %v891
  %v893 = vshll.u32 %v884, %v891
  %v894 = vshrl.u32 %v876, %v892
  %v895 = vor.u32 %v893, %v894
  %v896 = vsub.s32 4294967266, %v891
  %v897 = vadd.s32 %v896, 127
  %v898 = vshll.u32 %v897, 23
  %v899 = vor.u32 4788187, %v898
  %v900 = vand.u32 2147483647, %v899
  %v902 = vcvt.s32.f32 %v895
  %v903 = vmul.f32 %v902, %v900
  %v904 = vxor.u32 %v903, 2147483648
  %v905 = vsel %vm822, %v904, %v903
  %v906 = vsub.s32 4, %v882
  %v907 = vsel %vm822, %v906, %v882
  %v908 = vsel %vm821, %v91, %v905
  %v909 = vsel %vm821, 0, %v907
  %v910 = vcosq.f32.pop %v908
  %v911 = vsinq.f32.pop %v908
  %vm912 = vweird.f32 %v91
  %v913 = vadd.s32 %v909, 3
  %v914 = vand.u32 %v913, 3
  %vm915 = vcmp.lt.s32.totalorder %v914, 2
  %vm916 = vcmp.eq.s32.totalorder %v914, 0
  %v917 = vxor.u32 %v911, 2147483648
  %v918 = vsel %vm916, %v910, %v917
  %vm919 = vcmp.eq.s32.totalorder %v914, 2
  %v920 = vxor.u32 %v910, 2147483648
  %v921 = vsel %vm919, %v920, %v911
  %v922 = vsel %vm915, %v918, %v921
  %v923 = vsel %vm912, nan, %v922
  %v924 = vand.u32 2147483647, %v94
  %vm925 = vcmp.le.f32.partialorder %v924, 0.7853982
  %vm926 = vcmp.lt.s32.totalorder %v94, 0
  %v927 = vand.u32 %v94, 2139095040
  %v928 = vshrl.u32 %v927, 23
  %v929 = vsub.s32 %v928, 127
  %v930 = vand.u32 2147483647, %v94
  %v931 = vand.u32 %v930, 8388607
  %v932 = vor.u32 %v931, 8388608
  %v933 = vsub.s32 0, %v932
  %v934 = vadd.s32 %v929, 1
  %vm935 = vcmp.gt.s32.totalorder %v934, 0
  %v936 = vsel %vm935, %v934, 0
  %v937 = vshrl.u32 %v936, 5
  %v938 = vand.u32 %v936, 31
  %v939 = vsub.s32 32, %v938
  %v940 = vshrl.u32 683565275, %v939
  %v941 = vshll.u32 683565275, %v938
  %v942 = vshrl.u32 2475754826, %v939
  %v943 = vor.u32 %v941, %v942
  %v944 = vshll.u32 2475754826, %v938
  %v945 = vshrl.u32 2131351028, %v939
  %v946 = vor.u32 %v944, %v945
  %v947 = vshll.u32 2131351028, %v938
  %v948 = vshrl.u32 2102212464, %v939
  %v949 = vor.u32 %v947, %v948
  %v950 = vshll.u32 2102212464, %v938
  %v951 = vshrl.u32 920167782, %v939
  %v952 = vor.u32 %v950, %v951
  %v953 = vshll.u32 920167782, %v938
  %v954 = vshrl.u32 1326507024, %v939
  %v955 = vor.u32 %v953, %v954
  %vm956 = vcmp.lt.s32.totalorder %v937, 1
  %vm957 = vcmp.lt.s32.totalorder %v937, 2
  %vm958 = vcmp.lt.s32.totalorder %v937, 3
  %vm959 = vcmp.lt.s32.totalorder %v937, 4
  %v960 = vsel %vm956, %v940, %v943
  %v961 = vsel %vm959, %v949, 2102212464
  %v962 = vsel %vm958, %v946, %v961
  %v963 = vsel %vm957, %v960, %v962
  %v964 = vsel %vm956, %v943, %v946
  %v965 = vsel %vm959, %v952, 920167782
  %v966 = vsel %vm958, %v949, %v965
  %v967 = vsel %vm957, %v964, %v966
  %v968 = vsel %vm956, %v946, %v949
  %v969 = vsel %vm959, %v955, 1326507024
  %v970 = vsel %vm958, %v952, %v969
  %v971 = vsel %vm957, %v968, %v970
  %v972 = vshll.u32 %v932, 8
  %v973 = vmul.u32.u64.compose %v972, %v971
  %v974 = vextract.low.u32 %v973
  %v975 = vextract.high.u32 %v973
  %v976 = vmul.u32.u64.compose %v972, %v967
  %v977 = vextract.low.u32 %v976
  %v978 = vextract.high.u32 %v976
  %v979 = vmul.u32 %v972, %v963
  %v980 = vadd.s32 %v975, %v977
  %vm981 = vc.u32 %v975, %v977
  %v982 = vadd.s32 %v978, 1
  %v983 = vsel %vm981, %v982, %v978
  %v984 = vadd.s32 %v979, %v983
  %v985 = vadd.s32 %v984, 536870912
  %v986 = vshrl.u32 %v985, 30
  %v987 = vshll.u32 %v986, 30
  %v988 = vsub.s32 %v984, %v987
  %vm989 = vcmp.lt.s32.totalorder %v988, 0
  %v990 = vsub.s32 0, %v988
  %v991 = vsel %vm989, %v990, %v988
  %v992 = vclz %v991
  %v993 = vsub.s32 %v992, 2
  %vm994 = vcmp.gt.s32.totalorder 0, %v993
  %v995 = vsel %vm994, 0, %v993
  %v996 = vsub.s32 32, %v995
  %v997 = vshll.u32 %v988, %v995
  %v998 = vshrl.u32 %v980, %v996
  %v999 = vor.u32 %v997, %v998
  %v1000 = vsub.s32 4294967266, %v995
  %v1001 = vadd.s32 %v1000, 127
  %v1002 = vshll.u32 %v1001, 23
  %v1003 = vor.u32 4788187, %v1002
  %v1004 = vand.u32 2147483647, %v1003
  %v1006 = vcvt.s32.f32 %v999
  %v1007 = vmul.f32 %v1006, %v1004
  %v1008 = vxor.u32 %v1007, 2147483648
  %v1009 = vsel %vm926, %v1008, %v1007
  %v1010 = vsub.s32 4, %v986
  %v1011 = vsel %vm926, %v1010, %v986
  %v1012 = vsel %vm925, %v94, %v1009
  %v1013 = vsel %vm925, 0, %v1011
  %v1014 = vcosq.f32.pop %v1012
  %v1015 = vsinq.f32.pop %v1012
  %vm1016 = vweird.f32 %v94
  %v1017 = vand.u32 %v1013, 3
  %vm1018 = vcmp.lt.s32.totalorder %v1017, 2
  %vm1019 = vcmp.eq.s32.totalorder %v1017, 0
  %v1020 = vxor.u32 %v1015, 2147483648
  %v1021 = vsel %vm1019, %v1014, %v1020
  %vm1022 = vcmp.eq.s32.totalorder %v1017, 2
  %v1023 = vxor.u32 %v1014, 2147483648
  %v1024 = vsel %vm1022, %v1023, %v1015
  %v1025 = vsel %vm1018, %v1021, %v1024
  %v1026 = vsel %vm1016, nan, %v1025
  %v1027 = vand.u32 2147483647, %v95
  %vm1028 = vcmp.le.f32.partialorder %v1027, 0.7853982
  %vm1029 = vcmp.lt.s32.totalorder %v95, 0
  %v1030 = vand.u32 %v95, 2139095040
  %v1031 = vshrl.u32 %v1030, 23
  %v1032 = vsub.s32 %v1031, 127
  %v1033 = vand.u32 2147483647, %v95
  %v1034 = vand.u32 %v1033, 8388607
  %v1035 = vor.u32 %v1034, 8388608
  %v1036 = vsub.s32 0, %v1035
  %v1037 = vadd.s32 %v1032, 1
  %vm1038 = vcmp.gt.s32.totalorder %v1037, 0
  %v1039 = vsel %vm1038, %v1037, 0
  %v1040 = vshrl.u32 %v1039, 5
  %v1041 = vand.u32 %v1039, 31
  %v1042 = vsub.s32 32, %v1041
  %v1043 = vshrl.u32 683565275, %v1042
  %v1044 = vshll.u32 683565275, %v1041
  %v1045 = vshrl.u32 2475754826, %v1042
  %v1046 = vor.u32 %v1044, %v1045
  %v1047 = vshll.u32 2475754826, %v1041
  %v1048 = vshrl.u32 2131351028, %v1042
  %v1049 = vor.u32 %v1047, %v1048
  %v1050 = vshll.u32 2131351028, %v1041
  %v1051 = vshrl.u32 2102212464, %v1042
  %v1052 = vor.u32 %v1050, %v1051
  %v1053 = vshll.u32 2102212464, %v1041
  %v1054 = vshrl.u32 920167782, %v1042
  %v1055 = vor.u32 %v1053, %v1054
  %v1056 = vshll.u32 920167782, %v1041
  %v1057 = vshrl.u32 1326507024, %v1042
  %v1058 = vor.u32 %v1056, %v1057
  %vm1059 = vcmp.lt.s32.totalorder %v1040, 1
  %vm1060 = vcmp.lt.s32.totalorder %v1040, 2
  %vm1061 = vcmp.lt.s32.totalorder %v1040, 3
  %vm1062 = vcmp.lt.s32.totalorder %v1040, 4
  %v1063 = vsel %vm1059, %v1043, %v1046
  %v1064 = vsel %vm1062, %v1052, 2102212464
  %v1065 = vsel %vm1061, %v1049, %v1064
  %v1066 = vsel %vm1060, %v1063, %v1065
  %v1067 = vsel %vm1059, %v1046, %v1049
  %v1068 = vsel %vm1062, %v1055, 920167782
  %v1069 = vsel %vm1061, %v1052, %v1068
  %v1070 = vsel %vm1060, %v1067, %v1069
  %v1071 = vsel %vm1059, %v1049, %v1052
  %v1072 = vsel %vm1062, %v1058, 1326507024
  %v1073 = vsel %vm1061, %v1055, %v1072
  %v1074 = vsel %vm1060, %v1071, %v1073
  %v1075 = vshll.u32 %v1035, 8
  %v1076 = vmul.u32.u64.compose %v1075, %v1074
  %v1077 = vextract.low.u32 %v1076
  %v1078 = vextract.high.u32 %v1076
  %v1079 = vmul.u32.u64.compose %v1075, %v1070
  %v1080 = vextract.low.u32 %v1079
  %v1081 = vextract.high.u32 %v1079
  %v1082 = vmul.u32 %v1075, %v1066
  %v1083 = vadd.s32 %v1078, %v1080
  %vm1084 = vc.u32 %v1078, %v1080
  %v1085 = vadd.s32 %v1081, 1
  %v1086 = vsel %vm1084, %v1085, %v1081
  %v1087 = vadd.s32 %v1082, %v1086
  %v1088 = vadd.s32 %v1087, 536870912
  %v1089 = vshrl.u32 %v1088, 30
  %v1090 = vshll.u32 %v1089, 30
  %v1091 = vsub.s32 %v1087, %v1090
  %vm1092 = vcmp.lt.s32.totalorder %v1091, 0
  %v1093 = vsub.s32 0, %v1091
  %v1094 = vsel %vm1092, %v1093, %v1091
  %v1095 = vclz %v1094
  %v1096 = vsub.s32 %v1095, 2
  %vm1097 = vcmp.gt.s32.totalorder 0, %v1096
  %v1098 = vsel %vm1097, 0, %v1096
  %v1099 = vsub.s32 32, %v1098
  %v1100 = vshll.u32 %v1091, %v1098
  %v1101 = vshrl.u32 %v1083, %v1099
  %v1102 = vor.u32 %v1100, %v1101
  %v1103 = vsub.s32 4294967266, %v1098
  %v1104 = vadd.s32 %v1103, 127
  %v1105 = vshll.u32 %v1104, 23
  %v1106 = vor.u32 4788187, %v1105
  %v1107 = vand.u32 2147483647, %v1106
  %v1109 = vcvt.s32.f32 %v1102
  %v1110 = vmul.f32 %v1109, %v1107
  %v1111 = vxor.u32 %v1110, 2147483648
  %v1112 = vsel %vm1029, %v1111, %v1110
  %v1113 = vsub.s32 4, %v1089
  %v1114 = vsel %vm1029, %v1113, %v1089
  %v1115 = vsel %vm1028, %v95, %v1112
  %v1116 = vsel %vm1028, 0, %v1114
  %v1117 = vcosq.f32.pop %v1115
  %v1118 = vsinq.f32.pop %v1115
  %vm1119 = vweird.f32 %v95
  %v1120 = vand.u32 %v1116, 3
  %vm1121 = vcmp.lt.s32.totalorder %v1120, 2
  %vm1122 = vcmp.eq.s32.totalorder %v1120, 0
  %v1123 = vxor.u32 %v1118, 2147483648
  %v1124 = vsel %vm1122, %v1117, %v1123
  %vm1125 = vcmp.eq.s32.totalorder %v1120, 2
  %v1126 = vxor.u32 %v1117, 2147483648
  %v1127 = vsel %vm1125, %v1126, %v1118
  %v1128 = vsel %vm1121, %v1124, %v1127
  %v1129 = vsel %vm1119, nan, %v1128
  %v1130 = vand.u32 2147483647, %v94
  %vm1131 = vcmp.le.f32.partialorder %v1130, 0.7853982
  %vm1132 = vcmp.lt.s32.totalorder %v94, 0
  %v1133 = vand.u32 %v94, 2139095040
  %v1134 = vshrl.u32 %v1133, 23
  %v1135 = vsub.s32 %v1134, 127
  %v1136 = vand.u32 2147483647, %v94
  %v1137 = vand.u32 %v1136, 8388607
  %v1138 = vor.u32 %v1137, 8388608
  %v1139 = vsub.s32 0, %v1138
  %v1140 = vadd.s32 %v1135, 1
  %vm1141 = vcmp.gt.s32.totalorder %v1140, 0
  %v1142 = vsel %vm1141, %v1140, 0
  %v1143 = vshrl.u32 %v1142, 5
  %v1144 = vand.u32 %v1142, 31
  %v1145 = vsub.s32 32, %v1144
  %v1146 = vshrl.u32 683565275, %v1145
  %v1147 = vshll.u32 683565275, %v1144
  %v1148 = vshrl.u32 2475754826, %v1145
  %v1149 = vor.u32 %v1147, %v1148
  %v1150 = vshll.u32 2475754826, %v1144
  %v1151 = vshrl.u32 2131351028, %v1145
  %v1152 = vor.u32 %v1150, %v1151
  %v1153 = vshll.u32 2131351028, %v1144
  %v1154 = vshrl.u32 2102212464, %v1145
  %v1155 = vor.u32 %v1153, %v1154
  %v1156 = vshll.u32 2102212464, %v1144
  %v1157 = vshrl.u32 920167782, %v1145
  %v1158 = vor.u32 %v1156, %v1157
  %v1159 = vshll.u32 920167782, %v1144
  %v1160 = vshrl.u32 1326507024, %v1145
  %v1161 = vor.u32 %v1159, %v1160
  %vm1162 = vcmp.lt.s32.totalorder %v1143, 1
  %vm1163 = vcmp.lt.s32.totalorder %v1143, 2
  %vm1164 = vcmp.lt.s32.totalorder %v1143, 3
  %vm1165 = vcmp.lt.s32.totalorder %v1143, 4
  %v1166 = vsel %vm1162, %v1146, %v1149
  %v1167 = vsel %vm1165, %v1155, 2102212464
  %v1168 = vsel %vm1164, %v1152, %v1167
  %v1169 = vsel %vm1163, %v1166, %v1168
  %v1170 = vsel %vm1162, %v1149, %v1152
  %v1171 = vsel %vm1165, %v1158, 920167782
  %v1172 = vsel %vm1164, %v1155, %v1171
  %v1173 = vsel %vm1163, %v1170, %v1172
  %v1174 = vsel %vm1162, %v1152, %v1155
  %v1175 = vsel %vm1165, %v1161, 1326507024
  %v1176 = vsel %vm1164, %v1158, %v1175
  %v1177 = vsel %vm1163, %v1174, %v1176
  %v1178 = vshll.u32 %v1138, 8
  %v1179 = vmul.u32.u64.compose %v1178, %v1177
  %v1180 = vextract.low.u32 %v1179
  %v1181 = vextract.high.u32 %v1179
  %v1182 = vmul.u32.u64.compose %v1178, %v1173
  %v1183 = vextract.low.u32 %v1182
  %v1184 = vextract.high.u32 %v1182
  %v1185 = vmul.u32 %v1178, %v1169
  %v1186 = vadd.s32 %v1181, %v1183
  %vm1187 = vc.u32 %v1181, %v1183
  %v1188 = vadd.s32 %v1184, 1
  %v1189 = vsel %vm1187, %v1188, %v1184
  %v1190 = vadd.s32 %v1185, %v1189
  %v1191 = vadd.s32 %v1190, 536870912
  %v1192 = vshrl.u32 %v1191, 30
  %v1193 = vshll.u32 %v1192, 30
  %v1194 = vsub.s32 %v1190, %v1193
  %vm1195 = vcmp.lt.s32.totalorder %v1194, 0
  %v1196 = vsub.s32 0, %v1194
  %v1197 = vsel %vm1195, %v1196, %v1194
  %v1198 = vclz %v1197
  %v1199 = vsub.s32 %v1198, 2
  %vm1200 = vcmp.gt.s32.totalorder 0, %v1199
  %v1201 = vsel %vm1200, 0, %v1199
  %v1202 = vsub.s32 32, %v1201
  %v1203 = vshll.u32 %v1194, %v1201
  %v1204 = vshrl.u32 %v1186, %v1202
  %v1205 = vor.u32 %v1203, %v1204
  %v1206 = vsub.s32 4294967266, %v1201
  %v1207 = vadd.s32 %v1206, 127
  %v1208 = vshll.u32 %v1207, 23
  %v1209 = vor.u32 4788187, %v1208
  %v1210 = vand.u32 2147483647, %v1209
  %v1212 = vcvt.s32.f32 %v1205
  %v1213 = vmul.f32 %v1212, %v1210
  %v1214 = vxor.u32 %v1213, 2147483648
  %v1215 = vsel %vm1132, %v1214, %v1213
  %v1216 = vsub.s32 4, %v1192
  %v1217 = vsel %vm1132, %v1216, %v1192
  %v1218 = vsel %vm1131, %v94, %v1215
  %v1219 = vsel %vm1131, 0, %v1217
  %v1220 = vcosq.f32.pop %v1218
  %v1221 = vsinq.f32.pop %v1218
  %vm1222 = vweird.f32 %v94
  %v1223 = vadd.s32 %v1219, 3
  %v1224 = vand.u32 %v1223, 3
  %vm1225 = vcmp.lt.s32.totalorder %v1224, 2
  %vm1226 = vcmp.eq.s32.totalorder %v1224, 0
  %v1227 = vxor.u32 %v1221, 2147483648
  %v1228 = vsel %vm1226, %v1220, %v1227
  %vm1229 = vcmp.eq.s32.totalorder %v1224, 2
  %v1230 = vxor.u32 %v1220, 2147483648
  %v1231 = vsel %vm1229, %v1230, %v1221
  %v1232 = vsel %vm1225, %v1228, %v1231
  %v1233 = vsel %vm1222, nan, %v1232
  %v1234 = vand.u32 2147483647, %v95
  %vm1235 = vcmp.le.f32.partialorder %v1234, 0.7853982
  %vm1236 = vcmp.lt.s32.totalorder %v95, 0
  %v1237 = vand.u32 %v95, 2139095040
  %v1238 = vshrl.u32 %v1237, 23
  %v1239 = vsub.s32 %v1238, 127
  %v1240 = vand.u32 2147483647, %v95
  %v1241 = vand.u32 %v1240, 8388607
  %v1242 = vor.u32 %v1241, 8388608
  %v1243 = vsub.s32 0, %v1242
  %v1244 = vadd.s32 %v1239, 1
  %vm1245 = vcmp.gt.s32.totalorder %v1244, 0
  %v1246 = vsel %vm1245, %v1244, 0
  %v1247 = vshrl.u32 %v1246, 5
  %v1248 = vand.u32 %v1246, 31
  %v1249 = vsub.s32 32, %v1248
  %v1250 = vshrl.u32 683565275, %v1249
  %v1251 = vshll.u32 683565275, %v1248
  %v1252 = vshrl.u32 2475754826, %v1249
  %v1253 = vor.u32 %v1251, %v1252
  %v1254 = vshll.u32 2475754826, %v1248
  %v1255 = vshrl.u32 2131351028, %v1249
  %v1256 = vor.u32 %v1254, %v1255
  %v1257 = vshll.u32 2131351028, %v1248
  %v1258 = vshrl.u32 2102212464, %v1249
  %v1259 = vor.u32 %v1257, %v1258
  %v1260 = vshll.u32 2102212464, %v1248
  %v1261 = vshrl.u32 920167782, %v1249
  %v1262 = vor.u32 %v1260, %v1261
  %v1263 = vshll.u32 920167782, %v1248
  %v1264 = vshrl.u32 1326507024, %v1249
  %v1265 = vor.u32 %v1263, %v1264
  %vm1266 = vcmp.lt.s32.totalorder %v1247, 1
  %vm1267 = vcmp.lt.s32.totalorder %v1247, 2
  %vm1268 = vcmp.lt.s32.totalorder %v1247, 3
  %vm1269 = vcmp.lt.s32.totalorder %v1247, 4
  %v1270 = vsel %vm1266, %v1250, %v1253
  %v1271 = vsel %vm1269, %v1259, 2102212464
  %v1272 = vsel %vm1268, %v1256, %v1271
  %v1273 = vsel %vm1267, %v1270, %v1272
  %v1274 = vsel %vm1266, %v1253, %v1256
  %v1275 = vsel %vm1269, %v1262, 920167782
  %v1276 = vsel %vm1268, %v1259, %v1275
  %v1277 = vsel %vm1267, %v1274, %v1276
  %v1278 = vsel %vm1266, %v1256, %v1259
  %v1279 = vsel %vm1269, %v1265, 1326507024
  %v1280 = vsel %vm1268, %v1262, %v1279
  %v1281 = vsel %vm1267, %v1278, %v1280
  %v1282 = vshll.u32 %v1242, 8
  %v1283 = vmul.u32.u64.compose %v1282, %v1281
  %v1284 = vextract.low.u32 %v1283
  %v1285 = vextract.high.u32 %v1283
  %v1286 = vmul.u32.u64.compose %v1282, %v1277
  %v1287 = vextract.low.u32 %v1286
  %v1288 = vextract.high.u32 %v1286
  %v1289 = vmul.u32 %v1282, %v1273
  %v1290 = vadd.s32 %v1285, %v1287
  %vm1291 = vc.u32 %v1285, %v1287
  %v1292 = vadd.s32 %v1288, 1
  %v1293 = vsel %vm1291, %v1292, %v1288
  %v1294 = vadd.s32 %v1289, %v1293
  %v1295 = vadd.s32 %v1294, 536870912
  %v1296 = vshrl.u32 %v1295, 30
  %v1297 = vshll.u32 %v1296, 30
  %v1298 = vsub.s32 %v1294, %v1297
  %vm1299 = vcmp.lt.s32.totalorder %v1298, 0
  %v1300 = vsub.s32 0, %v1298
  %v1301 = vsel %vm1299, %v1300, %v1298
  %v1302 = vclz %v1301
  %v1303 = vsub.s32 %v1302, 2
  %vm1304 = vcmp.gt.s32.totalorder 0, %v1303
  %v1305 = vsel %vm1304, 0, %v1303
  %v1306 = vsub.s32 32, %v1305
  %v1307 = vshll.u32 %v1298, %v1305
  %v1308 = vshrl.u32 %v1290, %v1306
  %v1309 = vor.u32 %v1307, %v1308
  %v1310 = vsub.s32 4294967266, %v1305
  %v1311 = vadd.s32 %v1310, 127
  %v1312 = vshll.u32 %v1311, 23
  %v1313 = vor.u32 4788187, %v1312
  %v1314 = vand.u32 2147483647, %v1313
  %v1316 = vcvt.s32.f32 %v1309
  %v1317 = vmul.f32 %v1316, %v1314
  %v1318 = vxor.u32 %v1317, 2147483648
  %v1319 = vsel %vm1236, %v1318, %v1317
  %v1320 = vsub.s32 4, %v1296
  %v1321 = vsel %vm1236, %v1320, %v1296
  %v1322 = vsel %vm1235, %v95, %v1319
  %v1323 = vsel %vm1235, 0, %v1321
  %v1324 = vcosq.f32.pop %v1322
  %v1325 = vsinq.f32.pop %v1322
  %vm1326 = vweird.f32 %v95
  %v1327 = vadd.s32 %v1323, 3
  %v1328 = vand.u32 %v1327, 3
  %vm1329 = vcmp.lt.s32.totalorder %v1328, 2
  %vm1330 = vcmp.eq.s32.totalorder %v1328, 0
  %v1331 = vxor.u32 %v1325, 2147483648
  %v1332 = vsel %vm1330, %v1324, %v1331
  %vm1333 = vcmp.eq.s32.totalorder %v1328, 2
  %v1334 = vxor.u32 %v1324, 2147483648
  %v1335 = vsel %vm1333, %v1334, %v1325
  %v1336 = vsel %vm1329, %v1332, %v1335
  %v1337 = vsel %vm1326, nan, %v1336
  %v1338 = vmul.f32 %v1026, %v612
  %v1339 = vmul.f32 %v1129, %v715
  %v1340 = vmul.f32 %v1233, %v612
  %v1341 = vmul.f32 %v1337, %v715
  %v1342 = vsub.f32 0.0, %v819
  %v1343 = vsub.f32 0.0, %v923
  %v1344 = vmul.f32 %v819, %v198
  %v1345 = vmul.f32 %v923, %v301
  %v1346 = vmul.f32 %v1026, %v1344
  %v1347 = vmul.f32 %v1129, %v1345
  %v1348 = vmul.f32 %v1233, %v405
  %v1349 = vmul.f32 %v1337, %v509
  %v1350 = vadd.f32 %v1346, %v1348
  %v1351 = vadd.f32 %v1347, %v1349
  %v1352 = vmul.f32 %v1233, %v1344
  %v1353 = vmul.f32 %v1337, %v1345
  %v1354 = vmul.f32 %v1026, %v405
  %v1355 = vmul.f32 %v1129, %v509
  %v1356 = vsub.f32 %v1352, %v1354
  %v1357 = vsub.f32 %v1353, %v1355
  %v1358 = vmul.f32 %v612, %v198
  %v1359 = vmul.f32 %v715, %v301
  %v1360 = vld [vmem:[%s77] sm:$0xff]
  %v1361 = vld [vmem:[%s77 + $0x8] sm:$0xff]
  %s1362 = scalar_lea.vmem %s77, %s88
  %v1363 = vld [vmem:[%s1362] sm:$0xff]
  %v1364 = vld [vmem:[%s1362 + $0x8] sm:$0xff]
  %s1365 = scalar_lea.vmem %s77, %s92
  %v1366 = vld [vmem:[%s1365] sm:$0xff]
  %v1367 = vld [vmem:[%s1365 + $0x8] sm:$0xff]
  %v1368 = vand.u32 2147483647, %v1360
  %vm1369 = vcmp.le.f32.partialorder %v1368, 0.7853982
  %vm1370 = vcmp.lt.s32.totalorder %v1360, 0
  %v1371 = vand.u32 %v1360, 2139095040
  %v1372 = vshrl.u32 %v1371, 23
  %v1373 = vsub.s32 %v1372, 127
  %v1374 = vand.u32 2147483647, %v1360
  %v1375 = vand.u32 %v1374, 8388607
  %v1376 = vor.u32 %v1375, 8388608
  %v1377 = vsub.s32 0, %v1376
  %v1378 = vadd.s32 %v1373, 1
  %vm1379 = vcmp.gt.s32.totalorder %v1378, 0
  %v1380 = vsel %vm1379, %v1378, 0
  %v1381 = vshrl.u32 %v1380, 5
  %v1382 = vand.u32 %v1380, 31
  %v1383 = vsub.s32 32, %v1382
  %v1384 = vshrl.u32 683565275, %v1383
  %v1385 = vshll.u32 683565275, %v1382
  %v1386 = vshrl.u32 2475754826, %v1383
  %v1387 = vor.u32 %v1385, %v1386
  %v1388 = vshll.u32 2475754826, %v1382
  %v1389 = vshrl.u32 2131351028, %v1383
  %v1390 = vor.u32 %v1388, %v1389
  %v1391 = vshll.u32 2131351028, %v1382
  %v1392 = vshrl.u32 2102212464, %v1383
  %v1393 = vor.u32 %v1391, %v1392
  %v1394 = vshll.u32 2102212464, %v1382
  %v1395 = vshrl.u32 920167782, %v1383
  %v1396 = vor.u32 %v1394, %v1395
  %v1397 = vshll.u32 920167782, %v1382
  %v1398 = vshrl.u32 1326507024, %v1383
  %v1399 = vor.u32 %v1397, %v1398
  %vm1400 = vcmp.lt.s32.totalorder %v1381, 1
  %vm1401 = vcmp.lt.s32.totalorder %v1381, 2
  %vm1402 = vcmp.lt.s32.totalorder %v1381, 3
  %vm1403 = vcmp.lt.s32.totalorder %v1381, 4
  %v1404 = vsel %vm1400, %v1384, %v1387
  %v1405 = vsel %vm1403, %v1393, 2102212464
  %v1406 = vsel %vm1402, %v1390, %v1405
  %v1407 = vsel %vm1401, %v1404, %v1406
  %v1408 = vsel %vm1400, %v1387, %v1390
  %v1409 = vsel %vm1403, %v1396, 920167782
  %v1410 = vsel %vm1402, %v1393, %v1409
  %v1411 = vsel %vm1401, %v1408, %v1410
  %v1412 = vsel %vm1400, %v1390, %v1393
  %v1413 = vsel %vm1403, %v1399, 1326507024
  %v1414 = vsel %vm1402, %v1396, %v1413
  %v1415 = vsel %vm1401, %v1412, %v1414
  %v1416 = vshll.u32 %v1376, 8
  %v1417 = vmul.u32.u64.compose %v1416, %v1415
  %v1418 = vextract.low.u32 %v1417
  %v1419 = vextract.high.u32 %v1417
  %v1420 = vmul.u32.u64.compose %v1416, %v1411
  %v1421 = vextract.low.u32 %v1420
  %v1422 = vextract.high.u32 %v1420
  %v1423 = vmul.u32 %v1416, %v1407
  %v1424 = vadd.s32 %v1419, %v1421
  %vm1425 = vc.u32 %v1419, %v1421
  %v1426 = vadd.s32 %v1422, 1
  %v1427 = vsel %vm1425, %v1426, %v1422
  %v1428 = vadd.s32 %v1423, %v1427
  %v1429 = vadd.s32 %v1428, 536870912
  %v1430 = vshrl.u32 %v1429, 30
  %v1431 = vshll.u32 %v1430, 30
  %v1432 = vsub.s32 %v1428, %v1431
  %vm1433 = vcmp.lt.s32.totalorder %v1432, 0
  %v1434 = vsub.s32 0, %v1432
  %v1435 = vsel %vm1433, %v1434, %v1432
  %v1436 = vclz %v1435
  %v1437 = vsub.s32 %v1436, 2
  %vm1438 = vcmp.gt.s32.totalorder 0, %v1437
  %v1439 = vsel %vm1438, 0, %v1437
  %v1440 = vsub.s32 32, %v1439
  %v1441 = vshll.u32 %v1432, %v1439
  %v1442 = vshrl.u32 %v1424, %v1440
  %v1443 = vor.u32 %v1441, %v1442
  %v1444 = vsub.s32 4294967266, %v1439
  %v1445 = vadd.s32 %v1444, 127
  %v1446 = vshll.u32 %v1445, 23
  %v1447 = vor.u32 4788187, %v1446
  %v1448 = vand.u32 2147483647, %v1447
  %v1450 = vcvt.s32.f32 %v1443
  %v1451 = vmul.f32 %v1450, %v1448
  %v1452 = vxor.u32 %v1451, 2147483648
  %v1453 = vsel %vm1370, %v1452, %v1451
  %v1454 = vsub.s32 4, %v1430
  %v1455 = vsel %vm1370, %v1454, %v1430
  %v1456 = vsel %vm1369, %v1360, %v1453
  %v1457 = vsel %vm1369, 0, %v1455
  %v1458 = vcosq.f32.pop %v1456
  %v1459 = vsinq.f32.pop %v1456
  %vm1460 = vweird.f32 %v1360
  %v1461 = vand.u32 %v1457, 3
  %vm1462 = vcmp.lt.s32.totalorder %v1461, 2
  %vm1463 = vcmp.eq.s32.totalorder %v1461, 0
  %v1464 = vxor.u32 %v1459, 2147483648
  %v1465 = vsel %vm1463, %v1458, %v1464
  %vm1466 = vcmp.eq.s32.totalorder %v1461, 2
  %v1467 = vxor.u32 %v1458, 2147483648
  %v1468 = vsel %vm1466, %v1467, %v1459
  %v1469 = vsel %vm1462, %v1465, %v1468
  %v1470 = vsel %vm1460, nan, %v1469
  %v1471 = vand.u32 2147483647, %v1361
  %vm1472 = vcmp.le.f32.partialorder %v1471, 0.7853982
  %vm1473 = vcmp.lt.s32.totalorder %v1361, 0
  %v1474 = vand.u32 %v1361, 2139095040
  %v1475 = vshrl.u32 %v1474, 23
  %v1476 = vsub.s32 %v1475, 127
  %v1477 = vand.u32 2147483647, %v1361
  %v1478 = vand.u32 %v1477, 8388607
  %v1479 = vor.u32 %v1478, 8388608
  %v1480 = vsub.s32 0, %v1479
  %v1481 = vadd.s32 %v1476, 1
  %vm1482 = vcmp.gt.s32.totalorder %v1481, 0
  %v1483 = vsel %vm1482, %v1481, 0
  %v1484 = vshrl.u32 %v1483, 5
  %v1485 = vand.u32 %v1483, 31
  %v1486 = vsub.s32 32, %v1485
  %v1487 = vshrl.u32 683565275, %v1486
  %v1488 = vshll.u32 683565275, %v1485
  %v1489 = vshrl.u32 2475754826, %v1486
  %v1490 = vor.u32 %v1488, %v1489
  %v1491 = vshll.u32 2475754826, %v1485
  %v1492 = vshrl.u32 2131351028, %v1486
  %v1493 = vor.u32 %v1491, %v1492
  %v1494 = vshll.u32 2131351028, %v1485
  %v1495 = vshrl.u32 2102212464, %v1486
  %v1496 = vor.u32 %v1494, %v1495
  %v1497 = vshll.u32 2102212464, %v1485
  %v1498 = vshrl.u32 920167782, %v1486
  %v1499 = vor.u32 %v1497, %v1498
  %v1500 = vshll.u32 920167782, %v1485
  %v1501 = vshrl.u32 1326507024, %v1486
  %v1502 = vor.u32 %v1500, %v1501
  %vm1503 = vcmp.lt.s32.totalorder %v1484, 1
  %vm1504 = vcmp.lt.s32.totalorder %v1484, 2
  %vm1505 = vcmp.lt.s32.totalorder %v1484, 3
  %vm1506 = vcmp.lt.s32.totalorder %v1484, 4
  %v1507 = vsel %vm1503, %v1487, %v1490
  %v1508 = vsel %vm1506, %v1496, 2102212464
  %v1509 = vsel %vm1505, %v1493, %v1508
  %v1510 = vsel %vm1504, %v1507, %v1509
  %v1511 = vsel %vm1503, %v1490, %v1493
  %v1512 = vsel %vm1506, %v1499, 920167782
  %v1513 = vsel %vm1505, %v1496, %v1512
  %v1514 = vsel %vm1504, %v1511, %v1513
  %v1515 = vsel %vm1503, %v1493, %v1496
  %v1516 = vsel %vm1506, %v1502, 1326507024
  %v1517 = vsel %vm1505, %v1499, %v1516
  %v1518 = vsel %vm1504, %v1515, %v1517
  %v1519 = vshll.u32 %v1479, 8
  %v1520 = vmul.u32.u64.compose %v1519, %v1518
  %v1521 = vextract.low.u32 %v1520
  %v1522 = vextract.high.u32 %v1520
  %v1523 = vmul.u32.u64.compose %v1519, %v1514
  %v1524 = vextract.low.u32 %v1523
  %v1525 = vextract.high.u32 %v1523
  %v1526 = vmul.u32 %v1519, %v1510
  %v1527 = vadd.s32 %v1522, %v1524
  %vm1528 = vc.u32 %v1522, %v1524
  %v1529 = vadd.s32 %v1525, 1
  %v1530 = vsel %vm1528, %v1529, %v1525
  %v1531 = vadd.s32 %v1526, %v1530
  %v1532 = vadd.s32 %v1531, 536870912
  %v1533 = vshrl.u32 %v1532, 30
  %v1534 = vshll.u32 %v1533, 30
  %v1535 = vsub.s32 %v1531, %v1534
  %vm1536 = vcmp.lt.s32.totalorder %v1535, 0
  %v1537 = vsub.s32 0, %v1535
  %v1538 = vsel %vm1536, %v1537, %v1535
  %v1539 = vclz %v1538
  %v1540 = vsub.s32 %v1539, 2
  %vm1541 = vcmp.gt.s32.totalorder 0, %v1540
  %v1542 = vsel %vm1541, 0, %v1540
  %v1543 = vsub.s32 32, %v1542
  %v1544 = vshll.u32 %v1535, %v1542
  %v1545 = vshrl.u32 %v1527, %v1543
  %v1546 = vor.u32 %v1544, %v1545
  %v1547 = vsub.s32 4294967266, %v1542
  %v1548 = vadd.s32 %v1547, 127
  %v1549 = vshll.u32 %v1548, 23
  %v1550 = vor.u32 4788187, %v1549
  %v1551 = vand.u32 2147483647, %v1550
  %v1553 = vcvt.s32.f32 %v1546
  %v1554 = vmul.f32 %v1553, %v1551
  %v1555 = vxor.u32 %v1554, 2147483648
  %v1556 = vsel %vm1473, %v1555, %v1554
  %v1557 = vsub.s32 4, %v1533
  %v1558 = vsel %vm1473, %v1557, %v1533
  %v1559 = vsel %vm1472, %v1361, %v1556
  %v1560 = vsel %vm1472, 0, %v1558
  %v1561 = vcosq.f32.pop %v1559
  %v1562 = vsinq.f32.pop %v1559
  %vm1563 = vweird.f32 %v1361
  %v1564 = vand.u32 %v1560, 3
  %vm1565 = vcmp.lt.s32.totalorder %v1564, 2
  %vm1566 = vcmp.eq.s32.totalorder %v1564, 0
  %v1567 = vxor.u32 %v1562, 2147483648
  %v1568 = vsel %vm1566, %v1561, %v1567
  %vm1569 = vcmp.eq.s32.totalorder %v1564, 2
  %v1570 = vxor.u32 %v1561, 2147483648
  %v1571 = vsel %vm1569, %v1570, %v1562
  %v1572 = vsel %vm1565, %v1568, %v1571
  %v1573 = vsel %vm1563, nan, %v1572
  %v1574 = vand.u32 2147483647, %v1360
  %vm1575 = vcmp.le.f32.partialorder %v1574, 0.7853982
  %vm1576 = vcmp.lt.s32.totalorder %v1360, 0
  %v1577 = vand.u32 %v1360, 2139095040
  %v1578 = vshrl.u32 %v1577, 23
  %v1579 = vsub.s32 %v1578, 127
  %v1580 = vand.u32 2147483647, %v1360
  %v1581 = vand.u32 %v1580, 8388607
  %v1582 = vor.u32 %v1581, 8388608
  %v1583 = vsub.s32 0, %v1582
  %v1584 = vadd.s32 %v1579, 1
  %vm1585 = vcmp.gt.s32.totalorder %v1584, 0
  %v1586 = vsel %vm1585, %v1584, 0
  %v1587 = vshrl.u32 %v1586, 5
  %v1588 = vand.u32 %v1586, 31
  %v1589 = vsub.s32 32, %v1588
  %v1590 = vshrl.u32 683565275, %v1589
  %v1591 = vshll.u32 683565275, %v1588
  %v1592 = vshrl.u32 2475754826, %v1589
  %v1593 = vor.u32 %v1591, %v1592
  %v1594 = vshll.u32 2475754826, %v1588
  %v1595 = vshrl.u32 2131351028, %v1589
  %v1596 = vor.u32 %v1594, %v1595
  %v1597 = vshll.u32 2131351028, %v1588
  %v1598 = vshrl.u32 2102212464, %v1589
  %v1599 = vor.u32 %v1597, %v1598
  %v1600 = vshll.u32 2102212464, %v1588
  %v1601 = vshrl.u32 920167782, %v1589
  %v1602 = vor.u32 %v1600, %v1601
  %v1603 = vshll.u32 920167782, %v1588
  %v1604 = vshrl.u32 1326507024, %v1589
  %v1605 = vor.u32 %v1603, %v1604
  %vm1606 = vcmp.lt.s32.totalorder %v1587, 1
  %vm1607 = vcmp.lt.s32.totalorder %v1587, 2
  %vm1608 = vcmp.lt.s32.totalorder %v1587, 3
  %vm1609 = vcmp.lt.s32.totalorder %v1587, 4
  %v1610 = vsel %vm1606, %v1590, %v1593
  %v1611 = vsel %vm1609, %v1599, 2102212464
  %v1612 = vsel %vm1608, %v1596, %v1611
  %v1613 = vsel %vm1607, %v1610, %v1612
  %v1614 = vsel %vm1606, %v1593, %v1596
  %v1615 = vsel %vm1609, %v1602, 920167782
  %v1616 = vsel %vm1608, %v1599, %v1615
  %v1617 = vsel %vm1607, %v1614, %v1616
  %v1618 = vsel %vm1606, %v1596, %v1599
  %v1619 = vsel %vm1609, %v1605, 1326507024
  %v1620 = vsel %vm1608, %v1602, %v1619
  %v1621 = vsel %vm1607, %v1618, %v1620
  %v1622 = vshll.u32 %v1582, 8
  %v1623 = vmul.u32.u64.compose %v1622, %v1621
  %v1624 = vextract.low.u32 %v1623
  %v1625 = vextract.high.u32 %v1623
  %v1626 = vmul.u32.u64.compose %v1622, %v1617
  %v1627 = vextract.low.u32 %v1626
  %v1628 = vextract.high.u32 %v1626
  %v1629 = vmul.u32 %v1622, %v1613
  %v1630 = vadd.s32 %v1625, %v1627
  %vm1631 = vc.u32 %v1625, %v1627
  %v1632 = vadd.s32 %v1628, 1
  %v1633 = vsel %vm1631, %v1632, %v1628
  %v1634 = vadd.s32 %v1629, %v1633
  %v1635 = vadd.s32 %v1634, 536870912
  %v1636 = vshrl.u32 %v1635, 30
  %v1637 = vshll.u32 %v1636, 30
  %v1638 = vsub.s32 %v1634, %v1637
  %vm1639 = vcmp.lt.s32.totalorder %v1638, 0
  %v1640 = vsub.s32 0, %v1638
  %v1641 = vsel %vm1639, %v1640, %v1638
  %v1642 = vclz %v1641
  %v1643 = vsub.s32 %v1642, 2
  %vm1644 = vcmp.gt.s32.totalorder 0, %v1643
  %v1645 = vsel %vm1644, 0, %v1643
  %v1646 = vsub.s32 32, %v1645
  %v1647 = vshll.u32 %v1638, %v1645
  %v1648 = vshrl.u32 %v1630, %v1646
  %v1649 = vor.u32 %v1647, %v1648
  %v1650 = vsub.s32 4294967266, %v1645
  %v1651 = vadd.s32 %v1650, 127
  %v1652 = vshll.u32 %v1651, 23
  %v1653 = vor.u32 4788187, %v1652
  %v1654 = vand.u32 2147483647, %v1653
  %v1656 = vcvt.s32.f32 %v1649
  %v1657 = vmul.f32 %v1656, %v1654
  %v1658 = vxor.u32 %v1657, 2147483648
  %v1659 = vsel %vm1576, %v1658, %v1657
  %v1660 = vsub.s32 4, %v1636
  %v1661 = vsel %vm1576, %v1660, %v1636
  %v1662 = vsel %vm1575, %v1360, %v1659
  %v1663 = vsel %vm1575, 0, %v1661
  %v1664 = vcosq.f32.pop %v1662
  %v1665 = vsinq.f32.pop %v1662
  %vm1666 = vweird.f32 %v1360
  %v1667 = vadd.s32 %v1663, 3
  %v1668 = vand.u32 %v1667, 3
  %vm1669 = vcmp.lt.s32.totalorder %v1668, 2
  %vm1670 = vcmp.eq.s32.totalorder %v1668, 0
  %v1671 = vxor.u32 %v1665, 2147483648
  %v1672 = vsel %vm1670, %v1664, %v1671
  %vm1673 = vcmp.eq.s32.totalorder %v1668, 2
  %v1674 = vxor.u32 %v1664, 2147483648
  %v1675 = vsel %vm1673, %v1674, %v1665
  %v1676 = vsel %vm1669, %v1672, %v1675
  %v1677 = vsel %vm1666, nan, %v1676
  %v1678 = vand.u32 2147483647, %v1361
  %vm1679 = vcmp.le.f32.partialorder %v1678, 0.7853982
  %vm1680 = vcmp.lt.s32.totalorder %v1361, 0
  %v1681 = vand.u32 %v1361, 2139095040
  %v1682 = vshrl.u32 %v1681, 23
  %v1683 = vsub.s32 %v1682, 127
  %v1684 = vand.u32 2147483647, %v1361
  %v1685 = vand.u32 %v1684, 8388607
  %v1686 = vor.u32 %v1685, 8388608
  %v1687 = vsub.s32 0, %v1686
  %v1688 = vadd.s32 %v1683, 1
  %vm1689 = vcmp.gt.s32.totalorder %v1688, 0
  %v1690 = vsel %vm1689, %v1688, 0
  %v1691 = vshrl.u32 %v1690, 5
  %v1692 = vand.u32 %v1690, 31
  %v1693 = vsub.s32 32, %v1692
  %v1694 = vshrl.u32 683565275, %v1693
  %v1695 = vshll.u32 683565275, %v1692
  %v1696 = vshrl.u32 2475754826, %v1693
  %v1697 = vor.u32 %v1695, %v1696
  %v1698 = vshll.u32 2475754826, %v1692
  %v1699 = vshrl.u32 2131351028, %v1693
  %v1700 = vor.u32 %v1698, %v1699
  %v1701 = vshll.u32 2131351028, %v1692
  %v1702 = vshrl.u32 2102212464, %v1693
  %v1703 = vor.u32 %v1701, %v1702
  %v1704 = vshll.u32 2102212464, %v1692
  %v1705 = vshrl.u32 920167782, %v1693
  %v1706 = vor.u32 %v1704, %v1705
  %v1707 = vshll.u32 920167782, %v1692
  %v1708 = vshrl.u32 1326507024, %v1693
  %v1709 = vor.u32 %v1707, %v1708
  %vm1710 = vcmp.lt.s32.totalorder %v1691, 1
  %vm1711 = vcmp.lt.s32.totalorder %v1691, 2
  %vm1712 = vcmp.lt.s32.totalorder %v1691, 3
  %vm1713 = vcmp.lt.s32.totalorder %v1691, 4
  %v1714 = vsel %vm1710, %v1694, %v1697
  %v1715 = vsel %vm1713, %v1703, 2102212464
  %v1716 = vsel %vm1712, %v1700, %v1715
  %v1717 = vsel %vm1711, %v1714, %v1716
  %v1718 = vsel %vm1710, %v1697, %v1700
  %v1719 = vsel %vm1713, %v1706, 920167782
  %v1720 = vsel %vm1712, %v1703, %v1719
  %v1721 = vsel %vm1711, %v1718, %v1720
  %v1722 = vsel %vm1710, %v1700, %v1703
  %v1723 = vsel %vm1713, %v1709, 1326507024
  %v1724 = vsel %vm1712, %v1706, %v1723
  %v1725 = vsel %vm1711, %v1722, %v1724
  %v1726 = vshll.u32 %v1686, 8
  %v1727 = vmul.u32.u64.compose %v1726, %v1725
  %v1728 = vextract.low.u32 %v1727
  %v1729 = vextract.high.u32 %v1727
  %v1730 = vmul.u32.u64.compose %v1726, %v1721
  %v1731 = vextract.low.u32 %v1730
  %v1732 = vextract.high.u32 %v1730
  %v1733 = vmul.u32 %v1726, %v1717
  %v1734 = vadd.s32 %v1729, %v1731
  %vm1735 = vc.u32 %v1729, %v1731
  %v1736 = vadd.s32 %v1732, 1
  %v1737 = vsel %vm1735, %v1736, %v1732
  %v1738 = vadd.s32 %v1733, %v1737
  %v1739 = vadd.s32 %v1738, 536870912
  %v1740 = vshrl.u32 %v1739, 30
  %v1741 = vshll.u32 %v1740, 30
  %v1742 = vsub.s32 %v1738, %v1741
  %vm1743 = vcmp.lt.s32.totalorder %v1742, 0
  %v1744 = vsub.s32 0, %v1742
  %v1745 = vsel %vm1743, %v1744, %v1742
  %v1746 = vclz %v1745
  %v1747 = vsub.s32 %v1746, 2
  %vm1748 = vcmp.gt.s32.totalorder 0, %v1747
  %v1749 = vsel %vm1748, 0, %v1747
  %v1750 = vsub.s32 32, %v1749
  %v1751 = vshll.u32 %v1742, %v1749
  %v1752 = vshrl.u32 %v1734, %v1750
  %v1753 = vor.u32 %v1751, %v1752
  %v1754 = vsub.s32 4294967266, %v1749
  %v1755 = vadd.s32 %v1754, 127
  %v1756 = vshll.u32 %v1755, 23
  %v1757 = vor.u32 4788187, %v1756
  %v1758 = vand.u32 2147483647, %v1757
  %v1760 = vcvt.s32.f32 %v1753
  %v1761 = vmul.f32 %v1760, %v1758
  %v1762 = vxor.u32 %v1761, 2147483648
  %v1763 = vsel %vm1680, %v1762, %v1761
  %v1764 = vsub.s32 4, %v1740
  %v1765 = vsel %vm1680, %v1764, %v1740
  %v1766 = vsel %vm1679, %v1361, %v1763
  %v1767 = vsel %vm1679, 0, %v1765
  %v1768 = vcosq.f32.pop %v1766
  %v1769 = vsinq.f32.pop %v1766
  %vm1770 = vweird.f32 %v1361
  %v1771 = vadd.s32 %v1767, 3
  %v1772 = vand.u32 %v1771, 3
  %vm1773 = vcmp.lt.s32.totalorder %v1772, 2
  %vm1774 = vcmp.eq.s32.totalorder %v1772, 0
  %v1775 = vxor.u32 %v1769, 2147483648
  %v1776 = vsel %vm1774, %v1768, %v1775
  %vm1777 = vcmp.eq.s32.totalorder %v1772, 2
  %v1778 = vxor.u32 %v1768, 2147483648
  %v1779 = vsel %vm1777, %v1778, %v1769
  %v1780 = vsel %vm1773, %v1776, %v1779
  %v1781 = vsel %vm1770, nan, %v1780
  %v1782 = vand.u32 2147483647, %v1363
  %vm1783 = vcmp.le.f32.partialorder %v1782, 0.7853982
  %vm1784 = vcmp.lt.s32.totalorder %v1363, 0
  %v1785 = vand.u32 %v1363, 2139095040
  %v1786 = vshrl.u32 %v1785, 23
  %v1787 = vsub.s32 %v1786, 127
  %v1788 = vand.u32 2147483647, %v1363
  %v1789 = vand.u32 %v1788, 8388607
  %v1790 = vor.u32 %v1789, 8388608
  %v1791 = vsub.s32 0, %v1790
  %v1792 = vadd.s32 %v1787, 1
  %vm1793 = vcmp.gt.s32.totalorder %v1792, 0
  %v1794 = vsel %vm1793, %v1792, 0
  %v1795 = vshrl.u32 %v1794, 5
  %v1796 = vand.u32 %v1794, 31
  %v1797 = vsub.s32 32, %v1796
  %v1798 = vshrl.u32 683565275, %v1797
  %v1799 = vshll.u32 683565275, %v1796
  %v1800 = vshrl.u32 2475754826, %v1797
  %v1801 = vor.u32 %v1799, %v1800
  %v1802 = vshll.u32 2475754826, %v1796
  %v1803 = vshrl.u32 2131351028, %v1797
  %v1804 = vor.u32 %v1802, %v1803
  %v1805 = vshll.u32 2131351028, %v1796
  %v1806 = vshrl.u32 2102212464, %v1797
  %v1807 = vor.u32 %v1805, %v1806
  %v1808 = vshll.u32 2102212464, %v1796
  %v1809 = vshrl.u32 920167782, %v1797
  %v1810 = vor.u32 %v1808, %v1809
  %v1811 = vshll.u32 920167782, %v1796
  %v1812 = vshrl.u32 1326507024, %v1797
  %v1813 = vor.u32 %v1811, %v1812
  %vm1814 = vcmp.lt.s32.totalorder %v1795, 1
  %vm1815 = vcmp.lt.s32.totalorder %v1795, 2
  %vm1816 = vcmp.lt.s32.totalorder %v1795, 3
  %vm1817 = vcmp.lt.s32.totalorder %v1795, 4
  %v1818 = vsel %vm1814, %v1798, %v1801
  %v1819 = vsel %vm1817, %v1807, 2102212464
  %v1820 = vsel %vm1816, %v1804, %v1819
  %v1821 = vsel %vm1815, %v1818, %v1820
  %v1822 = vsel %vm1814, %v1801, %v1804
  %v1823 = vsel %vm1817, %v1810, 920167782
  %v1824 = vsel %vm1816, %v1807, %v1823
  %v1825 = vsel %vm1815, %v1822, %v1824
  %v1826 = vsel %vm1814, %v1804, %v1807
  %v1827 = vsel %vm1817, %v1813, 1326507024
  %v1828 = vsel %vm1816, %v1810, %v1827
  %v1829 = vsel %vm1815, %v1826, %v1828
  %v1830 = vshll.u32 %v1790, 8
  %v1831 = vmul.u32.u64.compose %v1830, %v1829
  %v1832 = vextract.low.u32 %v1831
  %v1833 = vextract.high.u32 %v1831
  %v1834 = vmul.u32.u64.compose %v1830, %v1825
  %v1835 = vextract.low.u32 %v1834
  %v1836 = vextract.high.u32 %v1834
  %v1837 = vmul.u32 %v1830, %v1821
  %v1838 = vadd.s32 %v1833, %v1835
  %vm1839 = vc.u32 %v1833, %v1835
  %v1840 = vadd.s32 %v1836, 1
  %v1841 = vsel %vm1839, %v1840, %v1836
  %v1842 = vadd.s32 %v1837, %v1841
  %v1843 = vadd.s32 %v1842, 536870912
  %v1844 = vshrl.u32 %v1843, 30
  %v1845 = vshll.u32 %v1844, 30
  %v1846 = vsub.s32 %v1842, %v1845
  %vm1847 = vcmp.lt.s32.totalorder %v1846, 0
  %v1848 = vsub.s32 0, %v1846
  %v1849 = vsel %vm1847, %v1848, %v1846
  %v1850 = vclz %v1849
  %v1851 = vsub.s32 %v1850, 2
  %vm1852 = vcmp.gt.s32.totalorder 0, %v1851
  %v1853 = vsel %vm1852, 0, %v1851
  %v1854 = vsub.s32 32, %v1853
  %v1855 = vshll.u32 %v1846, %v1853
  %v1856 = vshrl.u32 %v1838, %v1854
  %v1857 = vor.u32 %v1855, %v1856
  %v1858 = vsub.s32 4294967266, %v1853
  %v1859 = vadd.s32 %v1858, 127
  %v1860 = vshll.u32 %v1859, 23
  %v1861 = vor.u32 4788187, %v1860
  %v1862 = vand.u32 2147483647, %v1861
  %v1864 = vcvt.s32.f32 %v1857
  %v1865 = vmul.f32 %v1864, %v1862
  %v1866 = vxor.u32 %v1865, 2147483648
  %v1867 = vsel %vm1784, %v1866, %v1865
  %v1868 = vsub.s32 4, %v1844
  %v1869 = vsel %vm1784, %v1868, %v1844
  %v1870 = vsel %vm1783, %v1363, %v1867
  %v1871 = vsel %vm1783, 0, %v1869
  %v1872 = vcosq.f32.pop %v1870
  %v1873 = vsinq.f32.pop %v1870
  %vm1874 = vweird.f32 %v1363
  %v1875 = vand.u32 %v1871, 3
  %vm1876 = vcmp.lt.s32.totalorder %v1875, 2
  %vm1877 = vcmp.eq.s32.totalorder %v1875, 0
  %v1878 = vxor.u32 %v1873, 2147483648
  %v1879 = vsel %vm1877, %v1872, %v1878
  %vm1880 = vcmp.eq.s32.totalorder %v1875, 2
  %v1881 = vxor.u32 %v1872, 2147483648
  %v1882 = vsel %vm1880, %v1881, %v1873
  %v1883 = vsel %vm1876, %v1879, %v1882
  %v1884 = vsel %vm1874, nan, %v1883
  %v1885 = vand.u32 2147483647, %v1364
  %vm1886 = vcmp.le.f32.partialorder %v1885, 0.7853982
  %vm1887 = vcmp.lt.s32.totalorder %v1364, 0
  %v1888 = vand.u32 %v1364, 2139095040
  %v1889 = vshrl.u32 %v1888, 23
  %v1890 = vsub.s32 %v1889, 127
  %v1891 = vand.u32 2147483647, %v1364
  %v1892 = vand.u32 %v1891, 8388607
  %v1893 = vor.u32 %v1892, 8388608
  %v1894 = vsub.s32 0, %v1893
  %v1895 = vadd.s32 %v1890, 1
  %vm1896 = vcmp.gt.s32.totalorder %v1895, 0
  %v1897 = vsel %vm1896, %v1895, 0
  %v1898 = vshrl.u32 %v1897, 5
  %v1899 = vand.u32 %v1897, 31
  %v1900 = vsub.s32 32, %v1899
  %v1901 = vshrl.u32 683565275, %v1900
  %v1902 = vshll.u32 683565275, %v1899
  %v1903 = vshrl.u32 2475754826, %v1900
  %v1904 = vor.u32 %v1902, %v1903
  %v1905 = vshll.u32 2475754826, %v1899
  %v1906 = vshrl.u32 2131351028, %v1900
  %v1907 = vor.u32 %v1905, %v1906
  %v1908 = vshll.u32 2131351028, %v1899
  %v1909 = vshrl.u32 2102212464, %v1900
  %v1910 = vor.u32 %v1908, %v1909
  %v1911 = vshll.u32 2102212464, %v1899
  %v1912 = vshrl.u32 920167782, %v1900
  %v1913 = vor.u32 %v1911, %v1912
  %v1914 = vshll.u32 920167782, %v1899
  %v1915 = vshrl.u32 1326507024, %v1900
  %v1916 = vor.u32 %v1914, %v1915
  %vm1917 = vcmp.lt.s32.totalorder %v1898, 1
  %vm1918 = vcmp.lt.s32.totalorder %v1898, 2
  %vm1919 = vcmp.lt.s32.totalorder %v1898, 3
  %vm1920 = vcmp.lt.s32.totalorder %v1898, 4
  %v1921 = vsel %vm1917, %v1901, %v1904
  %v1922 = vsel %vm1920, %v1910, 2102212464
  %v1923 = vsel %vm1919, %v1907, %v1922
  %v1924 = vsel %vm1918, %v1921, %v1923
  %v1925 = vsel %vm1917, %v1904, %v1907
  %v1926 = vsel %vm1920, %v1913, 920167782
  %v1927 = vsel %vm1919, %v1910, %v1926
  %v1928 = vsel %vm1918, %v1925, %v1927
  %v1929 = vsel %vm1917, %v1907, %v1910
  %v1930 = vsel %vm1920, %v1916, 1326507024
  %v1931 = vsel %vm1919, %v1913, %v1930
  %v1932 = vsel %vm1918, %v1929, %v1931
  %v1933 = vshll.u32 %v1893, 8
  %v1934 = vmul.u32.u64.compose %v1933, %v1932
  %v1935 = vextract.low.u32 %v1934
  %v1936 = vextract.high.u32 %v1934
  %v1937 = vmul.u32.u64.compose %v1933, %v1928
  %v1938 = vextract.low.u32 %v1937
  %v1939 = vextract.high.u32 %v1937
  %v1940 = vmul.u32 %v1933, %v1924
  %v1941 = vadd.s32 %v1936, %v1938
  %vm1942 = vc.u32 %v1936, %v1938
  %v1943 = vadd.s32 %v1939, 1
  %v1944 = vsel %vm1942, %v1943, %v1939
  %v1945 = vadd.s32 %v1940, %v1944
  %v1946 = vadd.s32 %v1945, 536870912
  %v1947 = vshrl.u32 %v1946, 30
  %v1948 = vshll.u32 %v1947, 30
  %v1949 = vsub.s32 %v1945, %v1948
  %vm1950 = vcmp.lt.s32.totalorder %v1949, 0
  %v1951 = vsub.s32 0, %v1949
  %v1952 = vsel %vm1950, %v1951, %v1949
  %v1953 = vclz %v1952
  %v1954 = vsub.s32 %v1953, 2
  %vm1955 = vcmp.gt.s32.totalorder 0, %v1954
  %v1956 = vsel %vm1955, 0, %v1954
  %v1957 = vsub.s32 32, %v1956
  %v1958 = vshll.u32 %v1949, %v1956
  %v1959 = vshrl.u32 %v1941, %v1957
  %v1960 = vor.u32 %v1958, %v1959
  %v1961 = vsub.s32 4294967266, %v1956
  %v1962 = vadd.s32 %v1961, 127
  %v1963 = vshll.u32 %v1962, 23
  %v1964 = vor.u32 4788187, %v1963
  %v1965 = vand.u32 2147483647, %v1964
  %v1967 = vcvt.s32.f32 %v1960
  %v1968 = vmul.f32 %v1967, %v1965
  %v1969 = vxor.u32 %v1968, 2147483648
  %v1970 = vsel %vm1887, %v1969, %v1968
  %v1971 = vsub.s32 4, %v1947
  %v1972 = vsel %vm1887, %v1971, %v1947
  %v1973 = vsel %vm1886, %v1364, %v1970
  %v1974 = vsel %vm1886, 0, %v1972
  %v1975 = vcosq.f32.pop %v1973
  %v1976 = vsinq.f32.pop %v1973
  %vm1977 = vweird.f32 %v1364
  %v1978 = vand.u32 %v1974, 3
  %vm1979 = vcmp.lt.s32.totalorder %v1978, 2
  %vm1980 = vcmp.eq.s32.totalorder %v1978, 0
  %v1981 = vxor.u32 %v1976, 2147483648
  %v1982 = vsel %vm1980, %v1975, %v1981
  %vm1983 = vcmp.eq.s32.totalorder %v1978, 2
  %v1984 = vxor.u32 %v1975, 2147483648
  %v1985 = vsel %vm1983, %v1984, %v1976
  %v1986 = vsel %vm1979, %v1982, %v1985
  %v1987 = vsel %vm1977, nan, %v1986
  %v1988 = vand.u32 2147483647, %v1363
  %vm1989 = vcmp.le.f32.partialorder %v1988, 0.7853982
  %vm1990 = vcmp.lt.s32.totalorder %v1363, 0
  %v1991 = vand.u32 %v1363, 2139095040
  %v1992 = vshrl.u32 %v1991, 23
  %v1993 = vsub.s32 %v1992, 127
  %v1994 = vand.u32 2147483647, %v1363
  %v1995 = vand.u32 %v1994, 8388607
  %v1996 = vor.u32 %v1995, 8388608
  %v1997 = vsub.s32 0, %v1996
  %v1998 = vadd.s32 %v1993, 1
  %vm1999 = vcmp.gt.s32.totalorder %v1998, 0
  %v2000 = vsel %vm1999, %v1998, 0
  %v2001 = vshrl.u32 %v2000, 5
  %v2002 = vand.u32 %v2000, 31
  %v2003 = vsub.s32 32, %v2002
  %v2004 = vshrl.u32 683565275, %v2003
  %v2005 = vshll.u32 683565275, %v2002
  %v2006 = vshrl.u32 2475754826, %v2003
  %v2007 = vor.u32 %v2005, %v2006
  %v2008 = vshll.u32 2475754826, %v2002
  %v2009 = vshrl.u32 2131351028, %v2003
  %v2010 = vor.u32 %v2008, %v2009
  %v2011 = vshll.u32 2131351028, %v2002
  %v2012 = vshrl.u32 2102212464, %v2003
  %v2013 = vor.u32 %v2011, %v2012
  %v2014 = vshll.u32 2102212464, %v2002
  %v2015 = vshrl.u32 920167782, %v2003
  %v2016 = vor.u32 %v2014, %v2015
  %v2017 = vshll.u32 920167782, %v2002
  %v2018 = vshrl.u32 1326507024, %v2003
  %v2019 = vor.u32 %v2017, %v2018
  %vm2020 = vcmp.lt.s32.totalorder %v2001, 1
  %vm2021 = vcmp.lt.s32.totalorder %v2001, 2
  %vm2022 = vcmp.lt.s32.totalorder %v2001, 3
  %vm2023 = vcmp.lt.s32.totalorder %v2001, 4
  %v2024 = vsel %vm2020, %v2004, %v2007
  %v2025 = vsel %vm2023, %v2013, 2102212464
  %v2026 = vsel %vm2022, %v2010, %v2025
  %v2027 = vsel %vm2021, %v2024, %v2026
  %v2028 = vsel %vm2020, %v2007, %v2010
  %v2029 = vsel %vm2023, %v2016, 920167782
  %v2030 = vsel %vm2022, %v2013, %v2029
  %v2031 = vsel %vm2021, %v2028, %v2030
  %v2032 = vsel %vm2020, %v2010, %v2013
  %v2033 = vsel %vm2023, %v2019, 1326507024
  %v2034 = vsel %vm2022, %v2016, %v2033
  %v2035 = vsel %vm2021, %v2032, %v2034
  %v2036 = vshll.u32 %v1996, 8
  %v2037 = vmul.u32.u64.compose %v2036, %v2035
  %v2038 = vextract.low.u32 %v2037
  %v2039 = vextract.high.u32 %v2037
  %v2040 = vmul.u32.u64.compose %v2036, %v2031
  %v2041 = vextract.low.u32 %v2040
  %v2042 = vextract.high.u32 %v2040
  %v2043 = vmul.u32 %v2036, %v2027
  %v2044 = vadd.s32 %v2039, %v2041
  %vm2045 = vc.u32 %v2039, %v2041
  %v2046 = vadd.s32 %v2042, 1
  %v2047 = vsel %vm2045, %v2046, %v2042
  %v2048 = vadd.s32 %v2043, %v2047
  %v2049 = vadd.s32 %v2048, 536870912
  %v2050 = vshrl.u32 %v2049, 30
  %v2051 = vshll.u32 %v2050, 30
  %v2052 = vsub.s32 %v2048, %v2051
  %vm2053 = vcmp.lt.s32.totalorder %v2052, 0
  %v2054 = vsub.s32 0, %v2052
  %v2055 = vsel %vm2053, %v2054, %v2052
  %v2056 = vclz %v2055
  %v2057 = vsub.s32 %v2056, 2
  %vm2058 = vcmp.gt.s32.totalorder 0, %v2057
  %v2059 = vsel %vm2058, 0, %v2057
  %v2060 = vsub.s32 32, %v2059
  %v2061 = vshll.u32 %v2052, %v2059
  %v2062 = vshrl.u32 %v2044, %v2060
  %v2063 = vor.u32 %v2061, %v2062
  %v2064 = vsub.s32 4294967266, %v2059
  %v2065 = vadd.s32 %v2064, 127
  %v2066 = vshll.u32 %v2065, 23
  %v2067 = vor.u32 4788187, %v2066
  %v2068 = vand.u32 2147483647, %v2067
  %v2070 = vcvt.s32.f32 %v2063
  %v2071 = vmul.f32 %v2070, %v2068
  %v2072 = vxor.u32 %v2071, 2147483648
  %v2073 = vsel %vm1990, %v2072, %v2071
  %v2074 = vsub.s32 4, %v2050
  %v2075 = vsel %vm1990, %v2074, %v2050
  %v2076 = vsel %vm1989, %v1363, %v2073
  %v2077 = vsel %vm1989, 0, %v2075
  %v2078 = vcosq.f32.pop %v2076
  %v2079 = vsinq.f32.pop %v2076
  %vm2080 = vweird.f32 %v1363
  %v2081 = vadd.s32 %v2077, 3
  %v2082 = vand.u32 %v2081, 3
  %vm2083 = vcmp.lt.s32.totalorder %v2082, 2
  %vm2084 = vcmp.eq.s32.totalorder %v2082, 0
  %v2085 = vxor.u32 %v2079, 2147483648
  %v2086 = vsel %vm2084, %v2078, %v2085
  %vm2087 = vcmp.eq.s32.totalorder %v2082, 2
  %v2088 = vxor.u32 %v2078, 2147483648
  %v2089 = vsel %vm2087, %v2088, %v2079
  %v2090 = vsel %vm2083, %v2086, %v2089
  %v2091 = vsel %vm2080, nan, %v2090
  %v2092 = vand.u32 2147483647, %v1364
  %vm2093 = vcmp.le.f32.partialorder %v2092, 0.7853982
  %vm2094 = vcmp.lt.s32.totalorder %v1364, 0
  %v2095 = vand.u32 %v1364, 2139095040
  %v2096 = vshrl.u32 %v2095, 23
  %v2097 = vsub.s32 %v2096, 127
  %v2098 = vand.u32 2147483647, %v1364
  %v2099 = vand.u32 %v2098, 8388607
  %v2100 = vor.u32 %v2099, 8388608
  %v2101 = vsub.s32 0, %v2100
  %v2102 = vadd.s32 %v2097, 1
  %vm2103 = vcmp.gt.s32.totalorder %v2102, 0
  %v2104 = vsel %vm2103, %v2102, 0
  %v2105 = vshrl.u32 %v2104, 5
  %v2106 = vand.u32 %v2104, 31
  %v2107 = vsub.s32 32, %v2106
  %v2108 = vshrl.u32 683565275, %v2107
  %v2109 = vshll.u32 683565275, %v2106
  %v2110 = vshrl.u32 2475754826, %v2107
  %v2111 = vor.u32 %v2109, %v2110
  %v2112 = vshll.u32 2475754826, %v2106
  %v2113 = vshrl.u32 2131351028, %v2107
  %v2114 = vor.u32 %v2112, %v2113
  %v2115 = vshll.u32 2131351028, %v2106
  %v2116 = vshrl.u32 2102212464, %v2107
  %v2117 = vor.u32 %v2115, %v2116
  %v2118 = vshll.u32 2102212464, %v2106
  %v2119 = vshrl.u32 920167782, %v2107
  %v2120 = vor.u32 %v2118, %v2119
  %v2121 = vshll.u32 920167782, %v2106
  %v2122 = vshrl.u32 1326507024, %v2107
  %v2123 = vor.u32 %v2121, %v2122
  %vm2124 = vcmp.lt.s32.totalorder %v2105, 1
  %vm2125 = vcmp.lt.s32.totalorder %v2105, 2
  %vm2126 = vcmp.lt.s32.totalorder %v2105, 3
  %vm2127 = vcmp.lt.s32.totalorder %v2105, 4
  %v2128 = vsel %vm2124, %v2108, %v2111
  %v2129 = vsel %vm2127, %v2117, 2102212464
  %v2130 = vsel %vm2126, %v2114, %v2129
  %v2131 = vsel %vm2125, %v2128, %v2130
  %v2132 = vsel %vm2124, %v2111, %v2114
  %v2133 = vsel %vm2127, %v2120, 920167782
  %v2134 = vsel %vm2126, %v2117, %v2133
  %v2135 = vsel %vm2125, %v2132, %v2134
  %v2136 = vsel %vm2124, %v2114, %v2117
  %v2137 = vsel %vm2127, %v2123, 1326507024
  %v2138 = vsel %vm2126, %v2120, %v2137
  %v2139 = vsel %vm2125, %v2136, %v2138
  %v2140 = vshll.u32 %v2100, 8
  %v2141 = vmul.u32.u64.compose %v2140, %v2139
  %v2142 = vextract.low.u32 %v2141
  %v2143 = vextract.high.u32 %v2141
  %v2144 = vmul.u32.u64.compose %v2140, %v2135
  %v2145 = vextract.low.u32 %v2144
  %v2146 = vextract.high.u32 %v2144
  %v2147 = vmul.u32 %v2140, %v2131
  %v2148 = vadd.s32 %v2143, %v2145
  %vm2149 = vc.u32 %v2143, %v2145
  %v2150 = vadd.s32 %v2146, 1
  %v2151 = vsel %vm2149, %v2150, %v2146
  %v2152 = vadd.s32 %v2147, %v2151
  %v2153 = vadd.s32 %v2152, 536870912
  %v2154 = vshrl.u32 %v2153, 30
  %v2155 = vshll.u32 %v2154, 30
  %v2156 = vsub.s32 %v2152, %v2155
  %vm2157 = vcmp.lt.s32.totalorder %v2156, 0
  %v2158 = vsub.s32 0, %v2156
  %v2159 = vsel %vm2157, %v2158, %v2156
  %v2160 = vclz %v2159
  %v2161 = vsub.s32 %v2160, 2
  %vm2162 = vcmp.gt.s32.totalorder 0, %v2161
  %v2163 = vsel %vm2162, 0, %v2161
  %v2164 = vsub.s32 32, %v2163
  %v2165 = vshll.u32 %v2156, %v2163
  %v2166 = vshrl.u32 %v2148, %v2164
  %v2167 = vor.u32 %v2165, %v2166
  %v2168 = vsub.s32 4294967266, %v2163
  %v2169 = vadd.s32 %v2168, 127
  %v2170 = vshll.u32 %v2169, 23
  %v2171 = vor.u32 4788187, %v2170
  %v2172 = vand.u32 2147483647, %v2171
  %v2174 = vcvt.s32.f32 %v2167
  %v2175 = vmul.f32 %v2174, %v2172
  %v2176 = vxor.u32 %v2175, 2147483648
  %v2177 = vsel %vm2094, %v2176, %v2175
  %v2178 = vsub.s32 4, %v2154
  %v2179 = vsel %vm2094, %v2178, %v2154
  %v2180 = vsel %vm2093, %v1364, %v2177
  %v2181 = vsel %vm2093, 0, %v2179
  %v2182 = vcosq.f32.pop %v2180
  %v2183 = vsinq.f32.pop %v2180
  %vm2184 = vweird.f32 %v1364
  %v2185 = vadd.s32 %v2181, 3
  %v2186 = vand.u32 %v2185, 3
  %vm2187 = vcmp.lt.s32.totalorder %v2186, 2
  %vm2188 = vcmp.eq.s32.totalorder %v2186, 0
  %v2189 = vxor.u32 %v2183, 2147483648
  %v2190 = vsel %vm2188, %v2182, %v2189
  %vm2191 = vcmp.eq.s32.totalorder %v2186, 2
  %v2192 = vxor.u32 %v2182, 2147483648
  %v2193 = vsel %vm2191, %v2192, %v2183
  %v2194 = vsel %vm2187, %v2190, %v2193
  %v2195 = vsel %vm2184, nan, %v2194
  %v2196 = vand.u32 2147483647, %v1366
  %vm2197 = vcmp.le.f32.partialorder %v2196, 0.7853982
  %vm2198 = vcmp.lt.s32.totalorder %v1366, 0
  %v2199 = vand.u32 %v1366, 2139095040
  %v2200 = vshrl.u32 %v2199, 23
  %v2201 = vsub.s32 %v2200, 127
  %v2202 = vand.u32 2147483647, %v1366
  %v2203 = vand.u32 %v2202, 8388607
  %v2204 = vor.u32 %v2203, 8388608
  %v2205 = vsub.s32 0, %v2204
  %v2206 = vadd.s32 %v2201, 1
  %vm2207 = vcmp.gt.s32.totalorder %v2206, 0
  %v2208 = vsel %vm2207, %v2206, 0
  %v2209 = vshrl.u32 %v2208, 5
  %v2210 = vand.u32 %v2208, 31
  %v2211 = vsub.s32 32, %v2210
  %v2212 = vshrl.u32 683565275, %v2211
  %v2213 = vshll.u32 683565275, %v2210
  %v2214 = vshrl.u32 2475754826, %v2211
  %v2215 = vor.u32 %v2213, %v2214
  %v2216 = vshll.u32 2475754826, %v2210
  %v2217 = vshrl.u32 2131351028, %v2211
  %v2218 = vor.u32 %v2216, %v2217
  %v2219 = vshll.u32 2131351028, %v2210
  %v2220 = vshrl.u32 2102212464, %v2211
  %v2221 = vor.u32 %v2219, %v2220
  %v2222 = vshll.u32 2102212464, %v2210
  %v2223 = vshrl.u32 920167782, %v2211
  %v2224 = vor.u32 %v2222, %v2223
  %v2225 = vshll.u32 920167782, %v2210
  %v2226 = vshrl.u32 1326507024, %v2211
  %v2227 = vor.u32 %v2225, %v2226
  %vm2228 = vcmp.lt.s32.totalorder %v2209, 1
  %vm2229 = vcmp.lt.s32.totalorder %v2209, 2
  %vm2230 = vcmp.lt.s32.totalorder %v2209, 3
  %vm2231 = vcmp.lt.s32.totalorder %v2209, 4
  %v2232 = vsel %vm2228, %v2212, %v2215
  %v2233 = vsel %vm2231, %v2221, 2102212464
  %v2234 = vsel %vm2230, %v2218, %v2233
  %v2235 = vsel %vm2229, %v2232, %v2234
  %v2236 = vsel %vm2228, %v2215, %v2218
  %v2237 = vsel %vm2231, %v2224, 920167782
  %v2238 = vsel %vm2230, %v2221, %v2237
  %v2239 = vsel %vm2229, %v2236, %v2238
  %v2240 = vsel %vm2228, %v2218, %v2221
  %v2241 = vsel %vm2231, %v2227, 1326507024
  %v2242 = vsel %vm2230, %v2224, %v2241
  %v2243 = vsel %vm2229, %v2240, %v2242
  %v2244 = vshll.u32 %v2204, 8
  %v2245 = vmul.u32.u64.compose %v2244, %v2243
  %v2246 = vextract.low.u32 %v2245
  %v2247 = vextract.high.u32 %v2245
  %v2248 = vmul.u32.u64.compose %v2244, %v2239
  %v2249 = vextract.low.u32 %v2248
  %v2250 = vextract.high.u32 %v2248
  %v2251 = vmul.u32 %v2244, %v2235
  %v2252 = vadd.s32 %v2247, %v2249
  %vm2253 = vc.u32 %v2247, %v2249
  %v2254 = vadd.s32 %v2250, 1
  %v2255 = vsel %vm2253, %v2254, %v2250
  %v2256 = vadd.s32 %v2251, %v2255
  %v2257 = vadd.s32 %v2256, 536870912
  %v2258 = vshrl.u32 %v2257, 30
  %v2259 = vshll.u32 %v2258, 30
  %v2260 = vsub.s32 %v2256, %v2259
  %vm2261 = vcmp.lt.s32.totalorder %v2260, 0
  %v2262 = vsub.s32 0, %v2260
  %v2263 = vsel %vm2261, %v2262, %v2260
  %v2264 = vclz %v2263
  %v2265 = vsub.s32 %v2264, 2
  %vm2266 = vcmp.gt.s32.totalorder 0, %v2265
  %v2267 = vsel %vm2266, 0, %v2265
  %v2268 = vsub.s32 32, %v2267
  %v2269 = vshll.u32 %v2260, %v2267
  %v2270 = vshrl.u32 %v2252, %v2268
  %v2271 = vor.u32 %v2269, %v2270
  %v2272 = vsub.s32 4294967266, %v2267
  %v2273 = vadd.s32 %v2272, 127
  %v2274 = vshll.u32 %v2273, 23
  %v2275 = vor.u32 4788187, %v2274
  %v2276 = vand.u32 2147483647, %v2275
  %v2278 = vcvt.s32.f32 %v2271
  %v2279 = vmul.f32 %v2278, %v2276
  %v2280 = vxor.u32 %v2279, 2147483648
  %v2281 = vsel %vm2198, %v2280, %v2279
  %v2282 = vsub.s32 4, %v2258
  %v2283 = vsel %vm2198, %v2282, %v2258
  %v2284 = vsel %vm2197, %v1366, %v2281
  %v2285 = vsel %vm2197, 0, %v2283
  %v2286 = vcosq.f32.pop %v2284
  %v2287 = vsinq.f32.pop %v2284
  %vm2288 = vweird.f32 %v1366
  %v2289 = vand.u32 %v2285, 3
  %vm2290 = vcmp.lt.s32.totalorder %v2289, 2
  %vm2291 = vcmp.eq.s32.totalorder %v2289, 0
  %v2292 = vxor.u32 %v2287, 2147483648
  %v2293 = vsel %vm2291, %v2286, %v2292
  %vm2294 = vcmp.eq.s32.totalorder %v2289, 2
  %v2295 = vxor.u32 %v2286, 2147483648
  %v2296 = vsel %vm2294, %v2295, %v2287
  %v2297 = vsel %vm2290, %v2293, %v2296
  %v2298 = vsel %vm2288, nan, %v2297
  %v2299 = vand.u32 2147483647, %v1367
  %vm2300 = vcmp.le.f32.partialorder %v2299, 0.7853982
  %vm2301 = vcmp.lt.s32.totalorder %v1367, 0
  %v2302 = vand.u32 %v1367, 2139095040
  %v2303 = vshrl.u32 %v2302, 23
  %v2304 = vsub.s32 %v2303, 127
  %v2305 = vand.u32 2147483647, %v1367
  %v2306 = vand.u32 %v2305, 8388607
  %v2307 = vor.u32 %v2306, 8388608
  %v2308 = vsub.s32 0, %v2307
  %v2309 = vadd.s32 %v2304, 1
  %vm2310 = vcmp.gt.s32.totalorder %v2309, 0
  %v2311 = vsel %vm2310, %v2309, 0
  %v2312 = vshrl.u32 %v2311, 5
  %v2313 = vand.u32 %v2311, 31
  %v2314 = vsub.s32 32, %v2313
  %v2315 = vshrl.u32 683565275, %v2314
  %v2316 = vshll.u32 683565275, %v2313
  %v2317 = vshrl.u32 2475754826, %v2314
  %v2318 = vor.u32 %v2316, %v2317
  %v2319 = vshll.u32 2475754826, %v2313
  %v2320 = vshrl.u32 2131351028, %v2314
  %v2321 = vor.u32 %v2319, %v2320
  %v2322 = vshll.u32 2131351028, %v2313
  %v2323 = vshrl.u32 2102212464, %v2314
  %v2324 = vor.u32 %v2322, %v2323
  %v2325 = vshll.u32 2102212464, %v2313
  %v2326 = vshrl.u32 920167782, %v2314
  %v2327 = vor.u32 %v2325, %v2326
  %v2328 = vshll.u32 920167782, %v2313
  %v2329 = vshrl.u32 1326507024, %v2314
  %v2330 = vor.u32 %v2328, %v2329
  %vm2331 = vcmp.lt.s32.totalorder %v2312, 1
  %vm2332 = vcmp.lt.s32.totalorder %v2312, 2
  %vm2333 = vcmp.lt.s32.totalorder %v2312, 3
  %vm2334 = vcmp.lt.s32.totalorder %v2312, 4
  %v2335 = vsel %vm2331, %v2315, %v2318
  %v2336 = vsel %vm2334, %v2324, 2102212464
  %v2337 = vsel %vm2333, %v2321, %v2336
  %v2338 = vsel %vm2332, %v2335, %v2337
  %v2339 = vsel %vm2331, %v2318, %v2321
  %v2340 = vsel %vm2334, %v2327, 920167782
  %v2341 = vsel %vm2333, %v2324, %v2340
  %v2342 = vsel %vm2332, %v2339, %v2341
  %v2343 = vsel %vm2331, %v2321, %v2324
  %v2344 = vsel %vm2334, %v2330, 1326507024
  %v2345 = vsel %vm2333, %v2327, %v2344
  %v2346 = vsel %vm2332, %v2343, %v2345
  %v2347 = vshll.u32 %v2307, 8
  %v2348 = vmul.u32.u64.compose %v2347, %v2346
  %v2349 = vextract.low.u32 %v2348
  %v2350 = vextract.high.u32 %v2348
  %v2351 = vmul.u32.u64.compose %v2347, %v2342
  %v2352 = vextract.low.u32 %v2351
  %v2353 = vextract.high.u32 %v2351
  %v2354 = vmul.u32 %v2347, %v2338
  %v2355 = vadd.s32 %v2350, %v2352
  %vm2356 = vc.u32 %v2350, %v2352
  %v2357 = vadd.s32 %v2353, 1
  %v2358 = vsel %vm2356, %v2357, %v2353
  %v2359 = vadd.s32 %v2354, %v2358
  %v2360 = vadd.s32 %v2359, 536870912
  %v2361 = vshrl.u32 %v2360, 30
  %v2362 = vshll.u32 %v2361, 30
  %v2363 = vsub.s32 %v2359, %v2362
  %vm2364 = vcmp.lt.s32.totalorder %v2363, 0
  %v2365 = vsub.s32 0, %v2363
  %v2366 = vsel %vm2364, %v2365, %v2363
  %v2367 = vclz %v2366
  %v2368 = vsub.s32 %v2367, 2
  %vm2369 = vcmp.gt.s32.totalorder 0, %v2368
  %v2370 = vsel %vm2369, 0, %v2368
  %v2371 = vsub.s32 32, %v2370
  %v2372 = vshll.u32 %v2363, %v2370
  %v2373 = vshrl.u32 %v2355, %v2371
  %v2374 = vor.u32 %v2372, %v2373
  %v2375 = vsub.s32 4294967266, %v2370
  %v2376 = vadd.s32 %v2375, 127
  %v2377 = vshll.u32 %v2376, 23
  %v2378 = vor.u32 4788187, %v2377
  %v2379 = vand.u32 2147483647, %v2378
  %v2381 = vcvt.s32.f32 %v2374
  %v2382 = vmul.f32 %v2381, %v2379
  %v2383 = vxor.u32 %v2382, 2147483648
  %v2384 = vsel %vm2301, %v2383, %v2382
  %v2385 = vsub.s32 4, %v2361
  %v2386 = vsel %vm2301, %v2385, %v2361
  %v2387 = vsel %vm2300, %v1367, %v2384
  %v2388 = vsel %vm2300, 0, %v2386
  %v2389 = vcosq.f32.pop %v2387
  %v2390 = vsinq.f32.pop %v2387
  %vm2391 = vweird.f32 %v1367
  %v2392 = vand.u32 %v2388, 3
  %vm2393 = vcmp.lt.s32.totalorder %v2392, 2
  %vm2394 = vcmp.eq.s32.totalorder %v2392, 0
  %v2395 = vxor.u32 %v2390, 2147483648
  %v2396 = vsel %vm2394, %v2389, %v2395
  %vm2397 = vcmp.eq.s32.totalorder %v2392, 2
  %v2398 = vxor.u32 %v2389, 2147483648
  %v2399 = vsel %vm2397, %v2398, %v2390
  %v2400 = vsel %vm2393, %v2396, %v2399
  %v2401 = vsel %vm2391, nan, %v2400
  %v2402 = vand.u32 2147483647, %v1366
  %vm2403 = vcmp.le.f32.partialorder %v2402, 0.7853982
  %vm2404 = vcmp.lt.s32.totalorder %v1366, 0
  %v2405 = vand.u32 %v1366, 2139095040
  %v2406 = vshrl.u32 %v2405, 23
  %v2407 = vsub.s32 %v2406, 127
  %v2408 = vand.u32 2147483647, %v1366
  %v2409 = vand.u32 %v2408, 8388607
  %v2410 = vor.u32 %v2409, 8388608
  %v2411 = vsub.s32 0, %v2410
  %v2412 = vadd.s32 %v2407, 1
  %vm2413 = vcmp.gt.s32.totalorder %v2412, 0
  %v2414 = vsel %vm2413, %v2412, 0
  %v2415 = vshrl.u32 %v2414, 5
  %v2416 = vand.u32 %v2414, 31
  %v2417 = vsub.s32 32, %v2416
  %v2418 = vshrl.u32 683565275, %v2417
  %v2419 = vshll.u32 683565275, %v2416
  %v2420 = vshrl.u32 2475754826, %v2417
  %v2421 = vor.u32 %v2419, %v2420
  %v2422 = vshll.u32 2475754826, %v2416
  %v2423 = vshrl.u32 2131351028, %v2417
  %v2424 = vor.u32 %v2422, %v2423
  %v2425 = vshll.u32 2131351028, %v2416
  %v2426 = vshrl.u32 2102212464, %v2417
  %v2427 = vor.u32 %v2425, %v2426
  %v2428 = vshll.u32 2102212464, %v2416
  %v2429 = vshrl.u32 920167782, %v2417
  %v2430 = vor.u32 %v2428, %v2429
  %v2431 = vshll.u32 920167782, %v2416
  %v2432 = vshrl.u32 1326507024, %v2417
  %v2433 = vor.u32 %v2431, %v2432
  %vm2434 = vcmp.lt.s32.totalorder %v2415, 1
  %vm2435 = vcmp.lt.s32.totalorder %v2415, 2
  %vm2436 = vcmp.lt.s32.totalorder %v2415, 3
  %vm2437 = vcmp.lt.s32.totalorder %v2415, 4
  %v2438 = vsel %vm2434, %v2418, %v2421
  %v2439 = vsel %vm2437, %v2427, 2102212464
  %v2440 = vsel %vm2436, %v2424, %v2439
  %v2441 = vsel %vm2435, %v2438, %v2440
  %v2442 = vsel %vm2434, %v2421, %v2424
  %v2443 = vsel %vm2437, %v2430, 920167782
  %v2444 = vsel %vm2436, %v2427, %v2443
  %v2445 = vsel %vm2435, %v2442, %v2444
  %v2446 = vsel %vm2434, %v2424, %v2427
  %v2447 = vsel %vm2437, %v2433, 1326507024
  %v2448 = vsel %vm2436, %v2430, %v2447
  %v2449 = vsel %vm2435, %v2446, %v2448
  %v2450 = vshll.u32 %v2410, 8
  %v2451 = vmul.u32.u64.compose %v2450, %v2449
  %v2452 = vextract.low.u32 %v2451
  %v2453 = vextract.high.u32 %v2451
  %v2454 = vmul.u32.u64.compose %v2450, %v2445
  %v2455 = vextract.low.u32 %v2454
  %v2456 = vextract.high.u32 %v2454
  %v2457 = vmul.u32 %v2450, %v2441
  %v2458 = vadd.s32 %v2453, %v2455
  %vm2459 = vc.u32 %v2453, %v2455
  %v2460 = vadd.s32 %v2456, 1
  %v2461 = vsel %vm2459, %v2460, %v2456
  %v2462 = vadd.s32 %v2457, %v2461
  %v2463 = vadd.s32 %v2462, 536870912
  %v2464 = vshrl.u32 %v2463, 30
  %v2465 = vshll.u32 %v2464, 30
  %v2466 = vsub.s32 %v2462, %v2465
  %vm2467 = vcmp.lt.s32.totalorder %v2466, 0
  %v2468 = vsub.s32 0, %v2466
  %v2469 = vsel %vm2467, %v2468, %v2466
  %v2470 = vclz %v2469
  %v2471 = vsub.s32 %v2470, 2
  %vm2472 = vcmp.gt.s32.totalorder 0, %v2471
  %v2473 = vsel %vm2472, 0, %v2471
  %v2474 = vsub.s32 32, %v2473
  %v2475 = vshll.u32 %v2466, %v2473
  %v2476 = vshrl.u32 %v2458, %v2474
  %v2477 = vor.u32 %v2475, %v2476
  %v2478 = vsub.s32 4294967266, %v2473
  %v2479 = vadd.s32 %v2478, 127
  %v2480 = vshll.u32 %v2479, 23
  %v2481 = vor.u32 4788187, %v2480
  %v2482 = vand.u32 2147483647, %v2481
  %v2484 = vcvt.s32.f32 %v2477
  %v2485 = vmul.f32 %v2484, %v2482
  %v2486 = vxor.u32 %v2485, 2147483648
  %v2487 = vsel %vm2404, %v2486, %v2485
  %v2488 = vsub.s32 4, %v2464
  %v2489 = vsel %vm2404, %v2488, %v2464
  %v2490 = vsel %vm2403, %v1366, %v2487
  %v2491 = vsel %vm2403, 0, %v2489
  %v2492 = vcosq.f32.pop %v2490
  %v2493 = vsinq.f32.pop %v2490
  %vm2494 = vweird.f32 %v1366
  %v2495 = vadd.s32 %v2491, 3
  %v2496 = vand.u32 %v2495, 3
  %vm2497 = vcmp.lt.s32.totalorder %v2496, 2
  %vm2498 = vcmp.eq.s32.totalorder %v2496, 0
  %v2499 = vxor.u32 %v2493, 2147483648
  %v2500 = vsel %vm2498, %v2492, %v2499
  %vm2501 = vcmp.eq.s32.totalorder %v2496, 2
  %v2502 = vxor.u32 %v2492, 2147483648
  %v2503 = vsel %vm2501, %v2502, %v2493
  %v2504 = vsel %vm2497, %v2500, %v2503
  %v2505 = vsel %vm2494, nan, %v2504
  %v2506 = vand.u32 2147483647, %v1367
  %vm2507 = vcmp.le.f32.partialorder %v2506, 0.7853982
  %vm2508 = vcmp.lt.s32.totalorder %v1367, 0
  %v2509 = vand.u32 %v1367, 2139095040
  %v2510 = vshrl.u32 %v2509, 23
  %v2511 = vsub.s32 %v2510, 127
  %v2512 = vand.u32 2147483647, %v1367
  %v2513 = vand.u32 %v2512, 8388607
  %v2514 = vor.u32 %v2513, 8388608
  %v2515 = vsub.s32 0, %v2514
  %v2516 = vadd.s32 %v2511, 1
  %vm2517 = vcmp.gt.s32.totalorder %v2516, 0
  %v2518 = vsel %vm2517, %v2516, 0
  %v2519 = vshrl.u32 %v2518, 5
  %v2520 = vand.u32 %v2518, 31
  %v2521 = vsub.s32 32, %v2520
  %v2522 = vshrl.u32 683565275, %v2521
  %v2523 = vshll.u32 683565275, %v2520
  %v2524 = vshrl.u32 2475754826, %v2521
  %v2525 = vor.u32 %v2523, %v2524
  %v2526 = vshll.u32 2475754826, %v2520
  %v2527 = vshrl.u32 2131351028, %v2521
  %v2528 = vor.u32 %v2526, %v2527
  %v2529 = vshll.u32 2131351028, %v2520
  %v2530 = vshrl.u32 2102212464, %v2521
  %v2531 = vor.u32 %v2529, %v2530
  %v2532 = vshll.u32 2102212464, %v2520
  %v2533 = vshrl.u32 920167782, %v2521
  %v2534 = vor.u32 %v2532, %v2533
  %v2535 = vshll.u32 920167782, %v2520
  %v2536 = vshrl.u32 1326507024, %v2521
  %v2537 = vor.u32 %v2535, %v2536
  %vm2538 = vcmp.lt.s32.totalorder %v2519, 1
  %vm2539 = vcmp.lt.s32.totalorder %v2519, 2
  %vm2540 = vcmp.lt.s32.totalorder %v2519, 3
  %vm2541 = vcmp.lt.s32.totalorder %v2519, 4
  %v2542 = vsel %vm2538, %v2522, %v2525
  %v2543 = vsel %vm2541, %v2531, 2102212464
  %v2544 = vsel %vm2540, %v2528, %v2543
  %v2545 = vsel %vm2539, %v2542, %v2544
  %v2546 = vsel %vm2538, %v2525, %v2528
  %v2547 = vsel %vm2541, %v2534, 920167782
  %v2548 = vsel %vm2540, %v2531, %v2547
  %v2549 = vsel %vm2539, %v2546, %v2548
  %v2550 = vsel %vm2538, %v2528, %v2531
  %v2551 = vsel %vm2541, %v2537, 1326507024
  %v2552 = vsel %vm2540, %v2534, %v2551
  %v2553 = vsel %vm2539, %v2550, %v2552
  %v2554 = vshll.u32 %v2514, 8
  %v2555 = vmul.u32.u64.compose %v2554, %v2553
  %v2556 = vextract.low.u32 %v2555
  %v2557 = vextract.high.u32 %v2555
  %v2558 = vmul.u32.u64.compose %v2554, %v2549
  %v2559 = vextract.low.u32 %v2558
  %v2560 = vextract.high.u32 %v2558
  %v2561 = vmul.u32 %v2554, %v2545
  %v2562 = vadd.s32 %v2557, %v2559
  %vm2563 = vc.u32 %v2557, %v2559
  %v2564 = vadd.s32 %v2560, 1
  %v2565 = vsel %vm2563, %v2564, %v2560
  %v2566 = vadd.s32 %v2561, %v2565
  %v2567 = vadd.s32 %v2566, 536870912
  %v2568 = vshrl.u32 %v2567, 30
  %v2569 = vshll.u32 %v2568, 30
  %v2570 = vsub.s32 %v2566, %v2569
  %vm2571 = vcmp.lt.s32.totalorder %v2570, 0
  %v2572 = vsub.s32 0, %v2570
  %v2573 = vsel %vm2571, %v2572, %v2570
  %v2574 = vclz %v2573
  %v2575 = vsub.s32 %v2574, 2
  %vm2576 = vcmp.gt.s32.totalorder 0, %v2575
  %v2577 = vsel %vm2576, 0, %v2575
  %v2578 = vsub.s32 32, %v2577
  %v2579 = vshll.u32 %v2570, %v2577
  %v2580 = vshrl.u32 %v2562, %v2578
  %v2581 = vor.u32 %v2579, %v2580
  %v2582 = vsub.s32 4294967266, %v2577
  %v2583 = vadd.s32 %v2582, 127
  %v2584 = vshll.u32 %v2583, 23
  %v2585 = vor.u32 4788187, %v2584
  %v2586 = vand.u32 2147483647, %v2585
  %v2588 = vcvt.s32.f32 %v2581
  %v2589 = vmul.f32 %v2588, %v2586
  %v2590 = vxor.u32 %v2589, 2147483648
  %v2591 = vsel %vm2508, %v2590, %v2589
  %v2592 = vsub.s32 4, %v2568
  %v2593 = vsel %vm2508, %v2592, %v2568
  %v2594 = vsel %vm2507, %v1367, %v2591
  %v2595 = vsel %vm2507, 0, %v2593
  %v2596 = vcosq.f32.pop %v2594
  %v2597 = vsinq.f32.pop %v2594
  %vm2598 = vweird.f32 %v1367
  %v2599 = vadd.s32 %v2595, 3
  %v2600 = vand.u32 %v2599, 3
  %vm2601 = vcmp.lt.s32.totalorder %v2600, 2
  %vm2602 = vcmp.eq.s32.totalorder %v2600, 0
  %v2603 = vxor.u32 %v2597, 2147483648
  %v2604 = vsel %vm2602, %v2596, %v2603
  %vm2605 = vcmp.eq.s32.totalorder %v2600, 2
  %v2606 = vxor.u32 %v2596, 2147483648
  %v2607 = vsel %vm2605, %v2606, %v2597
  %v2608 = vsel %vm2601, %v2604, %v2607
  %v2609 = vsel %vm2598, nan, %v2608
  %v2610 = vmul.f32 %v2298, %v1884
  %v2611 = vmul.f32 %v2401, %v1987
  %v2612 = vmul.f32 %v2505, %v1884
  %v2613 = vmul.f32 %v2609, %v1987
  %v2614 = vsub.f32 0.0, %v2091
  %v2615 = vsub.f32 0.0, %v2195
  %v2616 = vmul.f32 %v2091, %v1470
  %v2617 = vmul.f32 %v2195, %v1573
  %v2618 = vmul.f32 %v2298, %v2616
  %v2619 = vmul.f32 %v2401, %v2617
  %v2620 = vmul.f32 %v2505, %v1677
  %v2621 = vmul.f32 %v2609, %v1781
  %v2622 = vadd.f32 %v2618, %v2620
  %v2623 = vadd.f32 %v2619, %v2621
  %v2624 = vmul.f32 %v2505, %v2616
  %v2625 = vmul.f32 %v2609, %v2617
  %v2626 = vmul.f32 %v2298, %v1677
  %v2627 = vmul.f32 %v2401, %v1781
  %v2628 = vsub.f32 %v2624, %v2626
  %v2629 = vsub.f32 %v2625, %v2627
  %v2630 = vmul.f32 %v1884, %v1470
  %v2631 = vmul.f32 %v1987, %v1573
  %v2632 = vsub.f32 %v1338, %v2610
  %v2633 = vsub.f32 %v1339, %v2611
  %v2634 = vsub.f32 %v1340, %v2612
  %v2635 = vsub.f32 %v1341, %v2613
  %v2636 = vsub.f32 %v1342, %v2614
  %v2637 = vsub.f32 %v1343, %v2615
  %v2638 = vsub.f32 %v1350, %v2622
  %v2639 = vsub.f32 %v1351, %v2623
  %v2640 = vsub.f32 %v1356, %v2628
  %v2641 = vsub.f32 %v1357, %v2629
  %v2642 = vsub.f32 %v1358, %v2630
  %v2643 = vsub.f32 %v1359, %v2631
  %v2644 = vld [vmem:[%s61] sm:$0xff]
  %v2645 = vld [vmem:[%s61 + $0x8] sm:$0xff]
  %v2646 = vmul.f32 %v2632, 0.053
  %v2647 = vmul.f32 %v2633, 0.053
  %v2648 = vand.u32 2147483647, %v2646
  %v2649 = vand.u32 2147483647, %v2647
  %v2650 = vmul.f32 %v2638, 0.075
  %v2651 = vmul.f32 %v2639, 0.075
  %v2652 = vadd.f32 %v2650, %v2644
  %v2653 = vadd.f32 %v2651, %v2645
  %v2654 = vand.u32 2147483647, %v2652
  %v2655 = vand.u32 2147483647, %v2653
  %v2656 = vmul.f32 %v2638, 0.105
  %v2657 = vmul.f32 %v2639, 0.105
  %v2658 = vadd.f32 %v2656, %v2644
  %v2659 = vadd.f32 %v2657, %v2645
  %v2660 = vand.u32 2147483647, %v2658
  %v2661 = vand.u32 2147483647, %v2659
  %v2662 = vand.u32 2147483647, %v2644
  %v2663 = vand.u32 2147483647, %v2645
  %v2664 = vmax.f32 %v2654, %v2648
  %v2665 = vmax.f32 %v2655, %v2649
  %v2666 = vadd.f32 %v2662, %v2664
  %v2667 = vadd.f32 %v2663, %v2665
  %v2668 = vmax.f32 %v2660, %v2648
  %v2669 = vmax.f32 %v2661, %v2649
  %v2670 = vadd.f32 %v2666, %v2668
  %v2671 = vadd.f32 %v2667, %v2669
  %s2672 = scalar_lea.vmem %s61, %s88
  %v2673 = vld [vmem:[%s2672] sm:$0xff]
  %v2674 = vld [vmem:[%s2672 + $0x8] sm:$0xff]
  %v2675 = vmul.f32 %v2634, 0.053
  %v2676 = vmul.f32 %v2635, 0.053
  %v2677 = vand.u32 2147483647, %v2675
  %v2678 = vand.u32 2147483647, %v2676
  %v2679 = vmul.f32 %v2640, 0.075
  %v2680 = vmul.f32 %v2641, 0.075
  %v2681 = vadd.f32 %v2679, %v2673
  %v2682 = vadd.f32 %v2680, %v2674
  %v2683 = vand.u32 2147483647, %v2681
  %v2684 = vand.u32 2147483647, %v2682
  %v2685 = vmul.f32 %v2640, 0.105
  %v2686 = vmul.f32 %v2641, 0.105
  %v2687 = vadd.f32 %v2685, %v2673
  %v2688 = vadd.f32 %v2686, %v2674
  %v2689 = vand.u32 2147483647, %v2687
  %v2690 = vand.u32 2147483647, %v2688
  %v2691 = vand.u32 2147483647, %v2673
  %v2692 = vand.u32 2147483647, %v2674
  %v2693 = vmax.f32 %v2683, %v2677
  %v2694 = vmax.f32 %v2684, %v2678
  %v2695 = vadd.f32 %v2691, %v2693
  %v2696 = vadd.f32 %v2692, %v2694
  %v2697 = vmax.f32 %v2689, %v2677
  %v2698 = vmax.f32 %v2690, %v2678
  %v2699 = vadd.f32 %v2695, %v2697
  %v2700 = vadd.f32 %v2696, %v2698
  %v2701 = vadd.f32 %v2670, %v2699
  %v2702 = vadd.f32 %v2671, %v2700
  %s2703 = scalar_lea.vmem %s61, %s92
  %v2704 = vld [vmem:[%s2703] sm:$0xff]
  %v2705 = vld [vmem:[%s2703 + $0x8] sm:$0xff]
  %v2706 = vmul.f32 %v2636, 0.053
  %v2707 = vmul.f32 %v2637, 0.053
  %v2708 = vand.u32 2147483647, %v2706
  %v2709 = vand.u32 2147483647, %v2707
  %v2710 = vmul.f32 %v2642, 0.075
  %v2711 = vmul.f32 %v2643, 0.075
  %v2712 = vadd.f32 %v2710, %v2704
  %v2713 = vadd.f32 %v2711, %v2705
  %v2714 = vand.u32 2147483647, %v2712
  %v2715 = vand.u32 2147483647, %v2713
  %v2716 = vmul.f32 %v2642, 0.105
  %v2717 = vmul.f32 %v2643, 0.105
  %v2718 = vadd.f32 %v2716, %v2704
  %v2719 = vadd.f32 %v2717, %v2705
  %v2720 = vand.u32 2147483647, %v2718
  %v2721 = vand.u32 2147483647, %v2719
  %v2722 = vand.u32 2147483647, %v2704
  %v2723 = vand.u32 2147483647, %v2705
  %v2724 = vmax.f32 %v2714, %v2708
  %v2725 = vmax.f32 %v2715, %v2709
  %v2726 = vadd.f32 %v2722, %v2724
  %v2727 = vadd.f32 %v2723, %v2725
  %v2728 = vmax.f32 %v2720, %v2708
  %v2729 = vmax.f32 %v2721, %v2709
  %v2730 = vadd.f32 %v2726, %v2728
  %v2731 = vadd.f32 %v2727, %v2729
  %v2732 = vadd.f32 %v2701, %v2730
  %v2733 = vadd.f32 %v2702, %v2731
  %v2734 = vld [vmem:[%s3] sm:$0xff]
  %v2735 = vld [vmem:[%s3 + $0x8] sm:$0xff]
  %v2736 = vadd.f32 %v2734, %v2732
  %v2737 = vadd.f32 %v2735, %v2733
  %2738 = vst [vmem:[%s3] sm:$0xff] %v2736
  %2739 = vst [vmem:[%s3 + $0x8] sm:$0xff] %v2737
  // Predicated region
  $region18: #{pose_bc_loss.1} parent=0 // pred_check
    _
  $region19: #{pose_bc_loss.1} parent=0 // pred_check_branch
    %2741 = sbr.rel (0) target = $region21
  $region20: #{pose_bc_loss.1} parent=0 // pred_region
    _
  $region21: #{pose_bc_loss.1} parent=0 // pred_fallthru
    _
  // Predicated region
  $region22: #{pose_bc_loss.1} parent=0 // pred_check
    _
  $region23: #{pose_bc_loss.1} parent=0 // pred_check_branch
    %2743 = sbr.rel (0) target = $region25
  $region24: #{pose_bc_loss.1} parent=0 // pred_region
    _
  $region25: #{pose_bc_loss.1} parent=0 // pred_fallthru
    _

</llo_original>
